<compile_context>
chip_gen: v5e
topology: v5e:2x2
jax: 0.10.0
libtpu: 0.0.40
codegen_flags: <defaults>
</compile_context>

<pallas_src>
import functools

import numpy as np
import jax
import jax.numpy as jnp
from jax.experimental import pallas as pl
from jax.experimental.pallas import tpu as pltpu

HIDDEN_SIZE = 16
INPUT_SIZE = 64
NUM_LAYERS = 2          # kernel structure hard-codes the 2 stacked LSTM layers
OUTPUT_SIZE = 2


def _lstm_kernel(x_ref,                      # (T*Bp, D)  time-major, batch padded to Bp
                 wih0_ref,                   # (D, 4H)   g-cols pre-scaled by 2
                 b0_ref,                     # (1, 4H)   b_ih0+b_hh0, g-cols pre-scaled
                 wblk_ref,                   # (2H, 8H)  [[whh0, wih1],[0, whh1]], g-cols scaled
                 b1_ref,                     # (1, 4H)   b_ih1+b_hh1, g-cols pre-scaled
                 wfc_ref, bfc_ref,           # (H, O), (1, O)
                 out_ref,                    # (B, O)
                 *, T, Bp):
    H = wblk_ref.shape[0] // 2
    B = out_ref.shape[0]

    # Hoisted layer-0 input projection over all timesteps, bias folded in once.
    gx0 = (jnp.dot(x_ref[...], wih0_ref[...], preferred_element_type=jnp.float32)
           + b0_ref[...])                                     # (T*Bp, 4H)

    wblk = wblk_ref[...]
    b1b = jnp.broadcast_to(b1_ref[...], (Bp, 4 * H))          # hoisted broadcast

    def act(gates):
        # Single EUP push for all four gates; g-columns were scaled by 2 on the host
        # so tanh(g) == 2*sigmoid(2g) - 1 (the fixup is a cheap VPU op).
        s = jax.nn.sigmoid(gates)
        i = s[:, 0 * H:1 * H]
        f = s[:, 1 * H:2 * H]
        g = 2.0 * s[:, 2 * H:3 * H] - 1.0
        o = s[:, 3 * H:4 * H]
        return i, f, g, o

    zeros_h = jnp.zeros((Bp, H), jnp.float32)                 # PyTorch default h0 = c0 = 0
    h1 = zeros_h
    c0 = zeros_h
    c1 = zeros_h
    rec0 = jnp.zeros((Bp, 4 * H), jnp.float32)                # h0(-1) @ whh0 == 0

    # Static, fully-unrolled time loop; state carried in registers.
    for t in range(T):
        # Layer 0: input projection precomputed, recurrent part comes from last step's
        # fused matmul (rec0).
        gates0 = gx0[t * Bp:(t + 1) * Bp, :] + rec0
        i0, f0, g0, o0 = act(gates0)
        c0 = f0 * c0 + i0 * g0
        h0 = o0 * jnp.tanh(c0)

        # Single fused recurrent matmul for this step:
        #   lanes [0, 4H)  -> h0(t) @ whh0            (gates0 recurrent part for t+1)
        #   lanes [4H, 8H) -> h0(t)@wih1 + h1(t-1)@whh1 (gates1 matmul part for t)
        z = jnp.dot(jnp.concatenate([h0, h1], axis=1), wblk,
                    preferred_element_type=jnp.float32)       # (Bp, 8H) = (Bp, 128)

        # Layer 1.
        gates1 = z[:, 4 * H:8 * H] + b1b
        i1, f1, g1, o1 = act(gates1)
        c1 = f1 * c1 + i1 * g1
        h1 = o1 * jnp.tanh(c1)

        rec0 = z[:, 0:4 * H]

    # lstm_out[:, -1, :] == h1 at the last step, then the fc head; drop padded rows.
    out = jnp.dot(h1, wfc_ref[...], preferred_element_type=jnp.float32) + bfc_ref[...]
    out_ref[...] = out[:B].astype(out_ref.dtype)


def prepare_params(params):
    """One-time weight layout prep (transpose, bias fold, block fusion, g-gate scaling)."""
    H = HIDDEN_SIZE
    # Scale the g-gate (cell-candidate) columns by 2 so tanh(x) == 2*sigmoid(2x) - 1.
    gscale = jnp.concatenate([jnp.ones(2 * H, jnp.float32),
                              2.0 * jnp.ones(H, jnp.float32),
                              jnp.ones(H, jnp.float32)])        # (4H,)

    wih0_t = params["w_ih0"].T * gscale                         # (D, 4H)
    whh0_t = params["w_hh0"].T * gscale                         # (H, 4H)
    b0 = ((params["b_ih0"] + params["b_hh0"]) * gscale)[None]   # (1, 4H)

    wih1_t = params["w_ih1"].T * gscale                         # (H, 4H)
    whh1_t = params["w_hh1"].T * gscale                         # (H, 4H)
    b1 = ((params["b_ih1"] + params["b_hh1"]) * gscale)[None]   # (1, 4H)

    # Block weight for the fused per-step recurrent matmul.
    wblk = jnp.concatenate(
        [jnp.concatenate([whh0_t, wih1_t], axis=1),
         jnp.concatenate([jnp.zeros((H, 4 * H), jnp.float32), whh1_t], axis=1)],
        axis=0)                                                  # (2H, 8H)

    return {
        "wih0": wih0_t.astype(jnp.float32),
        "b0": b0.astype(jnp.float32),
        "wblk": wblk.astype(jnp.float32),
        "b1": b1.astype(jnp.float32),
        "wfc": params["w_fc"].T.astype(jnp.float32),             # (H, O)
        "bfc": params["b_fc"][None].astype(jnp.float32),         # (1, O)
    }


@jax.jit
def lstm_forward(x, prep):
    """x: (batch, seq, input_size) float32. Returns (batch, output_size)."""
    B, T, D = x.shape
    O = OUTPUT_SIZE
    Bp = ((B + 7) // 8) * 8          # pad batch to full f32 sublane tiles

    # Time-major, batch-padded, flattened to (T*Bp, D); jit fuses these layout ops.
    x_t = jnp.transpose(x, (1, 0, 2))                            # (T, B, D)
    x_p = jnp.pad(x_t, ((0, 0), (0, Bp - B), (0, 0)))            # (T, Bp, D)
    x_2d = x_p.reshape(T * Bp, D)                                # (T*Bp, D)

    vmem = pl.BlockSpec(memory_space=pltpu.MemorySpace.VMEM)
    kernel = functools.partial(_lstm_kernel, T=T, Bp=Bp)

    return pl.pallas_call(
        kernel,
        out_shape=jax.ShapeDtypeStruct((B, O), jnp.float32),
        in_specs=[vmem] * 7,
        out_specs=vmem,
    )(x_2d, prep["wih0"], prep["b0"], prep["wblk"], prep["b1"],
      prep["wfc"], prep["bfc"])


def init_params(key):
    """Deterministic init matching PyTorch parameter shapes (uniform +/- 1/sqrt(H))."""
    H, D, O = HIDDEN_SIZE, INPUT_SIZE, OUTPUT_SIZE
    ks = jax.random.split(key, 10)
    s = 1.0 / np.sqrt(H)
    u = lambda k, shape: jax.random.uniform(k, shape, jnp.float32, -s, s)
    return {
        "w_ih0": u(ks[0], (4 * H, D)),
        "w_hh0": u(ks[1], (4 * H, H)),
        "b_ih0": u(ks[2], (4 * H,)),
        "b_hh0": u(ks[3], (4 * H,)),
        "w_ih1": u(ks[4], (4 * H, H)),
        "w_hh1": u(ks[5], (4 * H, H)),
        "b_ih1": u(ks[6], (4 * H,)),
        "b_hh1": u(ks[7], (4 * H,)),
        "w_fc": u(ks[8], (O, H)),
        "b_fc": u(ks[9], (O,)),
    }


def reference_forward(x, p):
    """Pure-JAX reference mirroring torch.nn.LSTM(batch_first=True) + Linear."""
    B, T, D = x.shape
    H = HIDDEN_SIZE

    def cell(xt, h, c, wih, whh, bih, bhh):
        g = xt @ wih.T + bih + h @ whh.T + bhh
        i = jax.nn.sigmoid(g[:, 0 * H:1 * H])
        f = jax.nn.sigmoid(g[:, 1 * H:2 * H])
        gg = jnp.tanh(g[:, 2 * H:3 * H])
        o = jax.nn.sigmoid(g[:, 3 * H:4 * H])
        c = f * c + i * gg
        h = o * jnp.tanh(c)
        return h, c

    h0 = c0 = h1 = c1 = jnp.zeros((B, H), jnp.float32)
    for t in range(T):
        h0, c0 = cell(x[:, t, :], h0, c0, p["w_ih0"], p["w_hh0"], p["b_ih0"], p["b_hh0"])
        h1, c1 = cell(h0, h1, c1, p["w_ih1"], p["w_hh1"], p["b_ih1"], p["b_hh1"])
    return h1 @ p["w_fc"].T + p["b_fc"]


if __name__ == "__main__":
    key = jax.random.PRNGKey(0)
    k_p, k_x = jax.random.split(key)
    params = init_params(k_p)
    prep = prepare_params(params)        # one-time, off the per-call hot path

    B, T = 2, 8
    x = jax.random.normal(k_x, (B, T, INPUT_SIZE), jnp.float32)

    out = lstm_forward(x, prep)
    out = jax.block_until_ready(out)

    ref = reference_forward(x, params)
    np.testing.assert_allclose(np.asarray(out), np.asarray(ref), rtol=2e-5, atol=2e-5)

    print("KERNEL_OK")
</pallas_src>

<mosaic_0001>
module attributes {stable_mosaic.version = 11 : i64} {
  func.func @_lstm_kernel(%arg0: memref<64x64xf32, #tpu.memory_space<vmem>>, %arg1: memref<64x64xf32, #tpu.memory_space<vmem>>, %arg2: memref<1x64xf32, #tpu.memory_space<vmem>>, %arg3: memref<32x128xf32, #tpu.memory_space<vmem>>, %arg4: memref<1x64xf32, #tpu.memory_space<vmem>>, %arg5: memref<16x2xf32, #tpu.memory_space<vmem>>, %arg6: memref<1x2xf32, #tpu.memory_space<vmem>>, %arg7: memref<2x2xf32, #tpu.memory_space<vmem>>) attributes {dimension_semantics = [], scalar_prefetch = 0 : i64, scratch_operands = 0 : i64, tpu.core_type = #tpu.core_type<tc>} {
    %c0 = arith.constant 0 : index
    %c0_0 = arith.constant 0 : index
    %0 = vector.load %arg0[%c0, %c0_0] : memref<64x64xf32, #tpu.memory_space<vmem>>, vector<64x64xf32>
    %c0_1 = arith.constant 0 : index
    %c0_2 = arith.constant 0 : index
    %1 = vector.load %arg1[%c0_1, %c0_2] : memref<64x64xf32, #tpu.memory_space<vmem>>, vector<64x64xf32>
    %cst = arith.constant dense<0.000000e+00> : vector<64x64xf32>
    %2 = tpu.matmul %0, %1, %cst {dimension_numbers = #tpu.dot_dimension_numbers<[1], [0], [0], [1], [0, 0, 1, 1], [], []>} : vector<64x64xf32>, vector<64x64xf32>, vector<64x64xf32> -> vector<64x64xf32>
    %c0_3 = arith.constant 0 : index
    %c0_4 = arith.constant 0 : index
    %3 = vector.load %arg2[%c0_3, %c0_4] : memref<1x64xf32, #tpu.memory_space<vmem>>, vector<1x64xf32>
    %4 = vector.broadcast %3 : vector<1x64xf32> to vector<64x64xf32>
    %5 = arith.addf %2, %4 : vector<64x64xf32>
    %c0_5 = arith.constant 0 : index
    %c0_6 = arith.constant 0 : index
    %6 = vector.load %arg3[%c0_5, %c0_6] : memref<32x128xf32, #tpu.memory_space<vmem>>, vector<32x128xf32>
    %c0_7 = arith.constant 0 : index
    %c0_8 = arith.constant 0 : index
    %7 = vector.load %arg4[%c0_7, %c0_8] : memref<1x64xf32, #tpu.memory_space<vmem>>, vector<1x64xf32>
    %8 = vector.shape_cast %7 : vector<1x64xf32> to vector<1x64xf32>
    %9 = vector.broadcast %8 : vector<1x64xf32> to vector<8x64xf32>
    %cst_9 = arith.constant 0.000000e+00 : f32
    %10 = vector.broadcast %cst_9 : f32 to vector<8x16xf32>
    %cst_10 = arith.constant 0.000000e+00 : f32
    %11 = vector.broadcast %cst_10 : f32 to vector<8x64xf32>
    %12 = vector.extract_strided_slice %5 {offsets = [0, 0], sizes = [8, 64], strides = [1, 1]} : vector<64x64xf32> to vector<8x64xf32>
    %13 = arith.addf %12, %11 : vector<8x64xf32>
    %14 = arith.negf %13 : vector<8x64xf32>
    %15 = math.exp %14 : vector<8x64xf32>
    %cst_11 = arith.constant 1.000000e+00 : f32
    %16 = vector.broadcast %cst_11 : f32 to vector<8x64xf32>
    %17 = arith.addf %16, %15 : vector<8x64xf32>
    %18 = arith.divf %16, %17 : vector<8x64xf32>
    %19 = vector.extract_strided_slice %18 {offsets = [0, 0], sizes = [8, 16], strides = [1, 1]} : vector<8x64xf32> to vector<8x16xf32>
    %20 = vector.extract_strided_slice %18 {offsets = [0, 16], sizes = [8, 16], strides = [1, 1]} : vector<8x64xf32> to vector<8x16xf32>
    %21 = vector.extract_strided_slice %18 {offsets = [0, 32], sizes = [8, 16], strides = [1, 1]} : vector<8x64xf32> to vector<8x16xf32>
    %cst_12 = arith.constant 2.000000e+00 : f32
    %22 = vector.broadcast %cst_12 : f32 to vector<8x16xf32>
    %23 = arith.mulf %22, %21 : vector<8x16xf32>
    %cst_13 = arith.constant 1.000000e+00 : f32
    %24 = vector.broadcast %cst_13 : f32 to vector<8x16xf32>
    %25 = arith.subf %23, %24 : vector<8x16xf32>
    %26 = vector.extract_strided_slice %18 {offsets = [0, 48], sizes = [8, 16], strides = [1, 1]} : vector<8x64xf32> to vector<8x16xf32>
    %27 = arith.mulf %20, %10 : vector<8x16xf32>
    %28 = arith.mulf %19, %25 : vector<8x16xf32>
    %29 = arith.addf %27, %28 : vector<8x16xf32>
    %30 = math.tanh %29 : vector<8x16xf32>
    %31 = arith.mulf %26, %30 : vector<8x16xf32>
    %32 = tpu.concatenate %31, %10 in 1 : vector<8x16xf32>, vector<8x16xf32> -> vector<8x32xf32>
    %cst_14 = arith.constant dense<0.000000e+00> : vector<8x128xf32>
    %33 = tpu.matmul %32, %6, %cst_14 {dimension_numbers = #tpu.dot_dimension_numbers<[1], [0], [0], [1], [0, 0, 1, 1], [], []>} : vector<8x32xf32>, vector<32x128xf32>, vector<8x128xf32> -> vector<8x128xf32>
    %34 = vector.extract_strided_slice %33 {offsets = [0, 64], sizes = [8, 64], strides = [1, 1]} : vector<8x128xf32> to vector<8x64xf32>
    %35 = arith.addf %34, %9 : vector<8x64xf32>
    %36 = arith.negf %35 : vector<8x64xf32>
    %37 = math.exp %36 : vector<8x64xf32>
    %cst_15 = arith.constant 1.000000e+00 : f32
    %38 = vector.broadcast %cst_15 : f32 to vector<8x64xf32>
    %39 = arith.addf %38, %37 : vector<8x64xf32>
    %40 = arith.divf %38, %39 : vector<8x64xf32>
    %41 = vector.extract_strided_slice %40 {offsets = [0, 0], sizes = [8, 16], strides = [1, 1]} : vector<8x64xf32> to vector<8x16xf32>
    %42 = vector.extract_strided_slice %40 {offsets = [0, 16], sizes = [8, 16], strides = [1, 1]} : vector<8x64xf32> to vector<8x16xf32>
    %43 = vector.extract_strided_slice %40 {offsets = [0, 32], sizes = [8, 16], strides = [1, 1]} : vector<8x64xf32> to vector<8x16xf32>
    %cst_16 = arith.constant 2.000000e+00 : f32
    %44 = vector.broadcast %cst_16 : f32 to vector<8x16xf32>
    %45 = arith.mulf %44, %43 : vector<8x16xf32>
    %cst_17 = arith.constant 1.000000e+00 : f32
    %46 = vector.broadcast %cst_17 : f32 to vector<8x16xf32>
    %47 = arith.subf %45, %46 : vector<8x16xf32>
    %48 = vector.extract_strided_slice %40 {offsets = [0, 48], sizes = [8, 16], strides = [1, 1]} : vector<8x64xf32> to vector<8x16xf32>
    %49 = arith.mulf %42, %10 : vector<8x16xf32>
    %50 = arith.mulf %41, %47 : vector<8x16xf32>
    %51 = arith.addf %49, %50 : vector<8x16xf32>
    %52 = math.tanh %51 : vector<8x16xf32>
    %53 = arith.mulf %48, %52 : vector<8x16xf32>
    %54 = vector.extract_strided_slice %33 {offsets = [0, 0], sizes = [8, 64], strides = [1, 1]} : vector<8x128xf32> to vector<8x64xf32>
    %55 = vector.extract_strided_slice %5 {offsets = [8, 0], sizes = [8, 64], strides = [1, 1]} : vector<64x64xf32> to vector<8x64xf32>
    %56 = arith.addf %55, %54 : vector<8x64xf32>
    %57 = arith.negf %56 : vector<8x64xf32>
    %58 = math.exp %57 : vector<8x64xf32>
    %cst_18 = arith.constant 1.000000e+00 : f32
    %59 = vector.broadcast %cst_18 : f32 to vector<8x64xf32>
    %60 = arith.addf %59, %58 : vector<8x64xf32>
    %61 = arith.divf %59, %60 : vector<8x64xf32>
    %62 = vector.extract_strided_slice %61 {offsets = [0, 0], sizes = [8, 16], strides = [1, 1]} : vector<8x64xf32> to vector<8x16xf32>
    %63 = vector.extract_strided_slice %61 {offsets = [0, 16], sizes = [8, 16], strides = [1, 1]} : vector<8x64xf32> to vector<8x16xf32>
    %64 = vector.extract_strided_slice %61 {offsets = [0, 32], sizes = [8, 16], strides = [1, 1]} : vector<8x64xf32> to vector<8x16xf32>
    %cst_19 = arith.constant 2.000000e+00 : f32
    %65 = vector.broadcast %cst_19 : f32 to vector<8x16xf32>
    %66 = arith.mulf %65, %64 : vector<8x16xf32>
    %cst_20 = arith.constant 1.000000e+00 : f32
    %67 = vector.broadcast %cst_20 : f32 to vector<8x16xf32>
    %68 = arith.subf %66, %67 : vector<8x16xf32>
    %69 = vector.extract_strided_slice %61 {offsets = [0, 48], sizes = [8, 16], strides = [1, 1]} : vector<8x64xf32> to vector<8x16xf32>
    %70 = arith.mulf %63, %29 : vector<8x16xf32>
    %71 = arith.mulf %62, %68 : vector<8x16xf32>
    %72 = arith.addf %70, %71 : vector<8x16xf32>
    %73 = math.tanh %72 : vector<8x16xf32>
    %74 = arith.mulf %69, %73 : vector<8x16xf32>
    %75 = tpu.concatenate %74, %53 in 1 : vector<8x16xf32>, vector<8x16xf32> -> vector<8x32xf32>
    %cst_21 = arith.constant dense<0.000000e+00> : vector<8x128xf32>
    %76 = tpu.matmul %75, %6, %cst_21 {dimension_numbers = #tpu.dot_dimension_numbers<[1], [0], [0], [1], [0, 0, 1, 1], [], []>} : vector<8x32xf32>, vector<32x128xf32>, vector<8x128xf32> -> vector<8x128xf32>
    %77 = vector.extract_strided_slice %76 {offsets = [0, 64], sizes = [8, 64], strides = [1, 1]} : vector<8x128xf32> to vector<8x64xf32>
    %78 = arith.addf %77, %9 : vector<8x64xf32>
    %79 = arith.negf %78 : vector<8x64xf32>
    %80 = math.exp %79 : vector<8x64xf32>
    %cst_22 = arith.constant 1.000000e+00 : f32
    %81 = vector.broadcast %cst_22 : f32 to vector<8x64xf32>
    %82 = arith.addf %81, %80 : vector<8x64xf32>
    %83 = arith.divf %81, %82 : vector<8x64xf32>
    %84 = vector.extract_strided_slice %83 {offsets = [0, 0], sizes = [8, 16], strides = [1, 1]} : vector<8x64xf32> to vector<8x16xf32>
    %85 = vector.extract_strided_slice %83 {offsets = [0, 16], sizes = [8, 16], strides = [1, 1]} : vector<8x64xf32> to vector<8x16xf32>
    %86 = vector.extract_strided_slice %83 {offsets = [0, 32], sizes = [8, 16], strides = [1, 1]} : vector<8x64xf32> to vector<8x16xf32>
    %cst_23 = arith.constant 2.000000e+00 : f32
    %87 = vector.broadcast %cst_23 : f32 to vector<8x16xf32>
    %88 = arith.mulf %87, %86 : vector<8x16xf32>
    %cst_24 = arith.constant 1.000000e+00 : f32
    %89 = vector.broadcast %cst_24 : f32 to vector<8x16xf32>
    %90 = arith.subf %88, %89 : vector<8x16xf32>
    %91 = vector.extract_strided_slice %83 {offsets = [0, 48], sizes = [8, 16], strides = [1, 1]} : vector<8x64xf32> to vector<8x16xf32>
    %92 = arith.mulf %85, %51 : vector<8x16xf32>
    %93 = arith.mulf %84, %90 : vector<8x16xf32>
    %94 = arith.addf %92, %93 : vector<8x16xf32>
    %95 = math.tanh %94 : vector<8x16xf32>
    %96 = arith.mulf %91, %95 : vector<8x16xf32>
    %97 = vector.extract_strided_slice %76 {offsets = [0, 0], sizes = [8, 64], strides = [1, 1]} : vector<8x128xf32> to vector<8x64xf32>
    %98 = vector.extract_strided_slice %5 {offsets = [16, 0], sizes = [8, 64], strides = [1, 1]} : vector<64x64xf32> to vector<8x64xf32>
    %99 = arith.addf %98, %97 : vector<8x64xf32>
    %100 = arith.negf %99 : vector<8x64xf32>
    %101 = math.exp %100 : vector<8x64xf32>
    %cst_25 = arith.constant 1.000000e+00 : f32
    %102 = vector.broadcast %cst_25 : f32 to vector<8x64xf32>
    %103 = arith.addf %102, %101 : vector<8x64xf32>
    %104 = arith.divf %102, %103 : vector<8x64xf32>
    %105 = vector.extract_strided_slice %104 {offsets = [0, 0], sizes = [8, 16], strides = [1, 1]} : vector<8x64xf32> to vector<8x16xf32>
    %106 = vector.extract_strided_slice %104 {offsets = [0, 16], sizes = [8, 16], strides = [1, 1]} : vector<8x64xf32> to vector<8x16xf32>
    %107 = vector.extract_strided_slice %104 {offsets = [0, 32], sizes = [8, 16], strides = [1, 1]} : vector<8x64xf32> to vector<8x16xf32>
    %cst_26 = arith.constant 2.000000e+00 : f32
    %108 = vector.broadcast %cst_26 : f32 to vector<8x16xf32>
    %109 = arith.mulf %108, %107 : vector<8x16xf32>
    %cst_27 = arith.constant 1.000000e+00 : f32
    %110 = vector.broadcast %cst_27 : f32 to vector<8x16xf32>
    %111 = arith.subf %109, %110 : vector<8x16xf32>
    %112 = vector.extract_strided_slice %104 {offsets = [0, 48], sizes = [8, 16], strides = [1, 1]} : vector<8x64xf32> to vector<8x16xf32>
    %113 = arith.mulf %106, %72 : vector<8x16xf32>
    %114 = arith.mulf %105, %111 : vector<8x16xf32>
    %115 = arith.addf %113, %114 : vector<8x16xf32>
    %116 = math.tanh %115 : vector<8x16xf32>
    %117 = arith.mulf %112, %116 : vector<8x16xf32>
    %118 = tpu.concatenate %117, %96 in 1 : vector<8x16xf32>, vector<8x16xf32> -> vector<8x32xf32>
    %cst_28 = arith.constant dense<0.000000e+00> : vector<8x128xf32>
    %119 = tpu.matmul %118, %6, %cst_28 {dimension_numbers = #tpu.dot_dimension_numbers<[1], [0], [0], [1], [0, 0, 1, 1], [], []>} : vector<8x32xf32>, vector<32x128xf32>, vector<8x128xf32> -> vector<8x128xf32>
    %120 = vector.extract_strided_slice %119 {offsets = [0, 64], sizes = [8, 64], strides = [1, 1]} : vector<8x128xf32> to vector<8x64xf32>
    %121 = arith.addf %120, %9 : vector<8x64xf32>
    %122 = arith.negf %121 : vector<8x64xf32>
    %123 = math.exp %122 : vector<8x64xf32>
    %cst_29 = arith.constant 1.000000e+00 : f32
    %124 = vector.broadcast %cst_29 : f32 to vector<8x64xf32>
    %125 = arith.addf %124, %123 : vector<8x64xf32>
    %126 = arith.divf %124, %125 : vector<8x64xf32>
    %127 = vector.extract_strided_slice %126 {offsets = [0, 0], sizes = [8, 16], strides = [1, 1]} : vector<8x64xf32> to vector<8x16xf32>
    %128 = vector.extract_strided_slice %126 {offsets = [0, 16], sizes = [8, 16], strides = [1, 1]} : vector<8x64xf32> to vector<8x16xf32>
    %129 = vector.extract_strided_slice %126 {offsets = [0, 32], sizes = [8, 16], strides = [1, 1]} : vector<8x64xf32> to vector<8x16xf32>
    %cst_30 = arith.constant 2.000000e+00 : f32
    %130 = vector.broadcast %cst_30 : f32 to vector<8x16xf32>
    %131 = arith.mulf %130, %129 : vector<8x16xf32>
    %cst_31 = arith.constant 1.000000e+00 : f32
    %132 = vector.broadcast %cst_31 : f32 to vector<8x16xf32>
    %133 = arith.subf %131, %132 : vector<8x16xf32>
    %134 = vector.extract_strided_slice %126 {offsets = [0, 48], sizes = [8, 16], strides = [1, 1]} : vector<8x64xf32> to vector<8x16xf32>
    %135 = arith.mulf %128, %94 : vector<8x16xf32>
    %136 = arith.mulf %127, %133 : vector<8x16xf32>
    %137 = arith.addf %135, %136 : vector<8x16xf32>
    %138 = math.tanh %137 : vector<8x16xf32>
    %139 = arith.mulf %134, %138 : vector<8x16xf32>
    %140 = vector.extract_strided_slice %119 {offsets = [0, 0], sizes = [8, 64], strides = [1, 1]} : vector<8x128xf32> to vector<8x64xf32>
    %141 = vector.extract_strided_slice %5 {offsets = [24, 0], sizes = [8, 64], strides = [1, 1]} : vector<64x64xf32> to vector<8x64xf32>
    %142 = arith.addf %141, %140 : vector<8x64xf32>
    %143 = arith.negf %142 : vector<8x64xf32>
    %144 = math.exp %143 : vector<8x64xf32>
    %cst_32 = arith.constant 1.000000e+00 : f32
    %145 = vector.broadcast %cst_32 : f32 to vector<8x64xf32>
    %146 = arith.addf %145, %144 : vector<8x64xf32>
    %147 = arith.divf %145, %146 : vector<8x64xf32>
    %148 = vector.extract_strided_slice %147 {offsets = [0, 0], sizes = [8, 16], strides = [1, 1]} : vector<8x64xf32> to vector<8x16xf32>
    %149 = vector.extract_strided_slice %147 {offsets = [0, 16], sizes = [8, 16], strides = [1, 1]} : vector<8x64xf32> to vector<8x16xf32>
    %150 = vector.extract_strided_slice %147 {offsets = [0, 32], sizes = [8, 16], strides = [1, 1]} : vector<8x64xf32> to vector<8x16xf32>
    %cst_33 = arith.constant 2.000000e+00 : f32
    %151 = vector.broadcast %cst_33 : f32 to vector<8x16xf32>
    %152 = arith.mulf %151, %150 : vector<8x16xf32>
    %cst_34 = arith.constant 1.000000e+00 : f32
    %153 = vector.broadcast %cst_34 : f32 to vector<8x16xf32>
    %154 = arith.subf %152, %153 : vector<8x16xf32>
    %155 = vector.extract_strided_slice %147 {offsets = [0, 48], sizes = [8, 16], strides = [1, 1]} : vector<8x64xf32> to vector<8x16xf32>
    %156 = arith.mulf %149, %115 : vector<8x16xf32>
    %157 = arith.mulf %148, %154 : vector<8x16xf32>
    %158 = arith.addf %156, %157 : vector<8x16xf32>
    %159 = math.tanh %158 : vector<8x16xf32>
    %160 = arith.mulf %155, %159 : vector<8x16xf32>
    %161 = tpu.concatenate %160, %139 in 1 : vector<8x16xf32>, vector<8x16xf32> -> vector<8x32xf32>
    %cst_35 = arith.constant dense<0.000000e+00> : vector<8x128xf32>
    %162 = tpu.matmul %161, %6, %cst_35 {dimension_numbers = #tpu.dot_dimension_numbers<[1], [0], [0], [1], [0, 0, 1, 1], [], []>} : vector<8x32xf32>, vector<32x128xf32>, vector<8x128xf32> -> vector<8x128xf32>
    %163 = vector.extract_strided_slice %162 {offsets = [0, 64], sizes = [8, 64], strides = [1, 1]} : vector<8x128xf32> to vector<8x64xf32>
    %164 = arith.addf %163, %9 : vector<8x64xf32>
    %165 = arith.negf %164 : vector<8x64xf32>
    %166 = math.exp %165 : vector<8x64xf32>
    %cst_36 = arith.constant 1.000000e+00 : f32
    %167 = vector.broadcast %cst_36 : f32 to vector<8x64xf32>
    %168 = arith.addf %167, %166 : vector<8x64xf32>
    %169 = arith.divf %167, %168 : vector<8x64xf32>
    %170 = vector.extract_strided_slice %169 {offsets = [0, 0], sizes = [8, 16], strides = [1, 1]} : vector<8x64xf32> to vector<8x16xf32>
    %171 = vector.extract_strided_slice %169 {offsets = [0, 16], sizes = [8, 16], strides = [1, 1]} : vector<8x64xf32> to vector<8x16xf32>
    %172 = vector.extract_strided_slice %169 {offsets = [0, 32], sizes = [8, 16], strides = [1, 1]} : vector<8x64xf32> to vector<8x16xf32>
    %cst_37 = arith.constant 2.000000e+00 : f32
    %173 = vector.broadcast %cst_37 : f32 to vector<8x16xf32>
    %174 = arith.mulf %173, %172 : vector<8x16xf32>
    %cst_38 = arith.constant 1.000000e+00 : f32
    %175 = vector.broadcast %cst_38 : f32 to vector<8x16xf32>
    %176 = arith.subf %174, %175 : vector<8x16xf32>
    %177 = vector.extract_strided_slice %169 {offsets = [0, 48], sizes = [8, 16], strides = [1, 1]} : vector<8x64xf32> to vector<8x16xf32>
    %178 = arith.mulf %171, %137 : vector<8x16xf32>
    %179 = arith.mulf %170, %176 : vector<8x16xf32>
    %180 = arith.addf %178, %179 : vector<8x16xf32>
    %181 = math.tanh %180 : vector<8x16xf32>
    %182 = arith.mulf %177, %181 : vector<8x16xf32>
    %183 = vector.extract_strided_slice %162 {offsets = [0, 0], sizes = [8, 64], strides = [1, 1]} : vector<8x128xf32> to vector<8x64xf32>
    %184 = vector.extract_strided_slice %5 {offsets = [32, 0], sizes = [8, 64], strides = [1, 1]} : vector<64x64xf32> to vector<8x64xf32>
    %185 = arith.addf %184, %183 : vector<8x64xf32>
    %186 = arith.negf %185 : vector<8x64xf32>
    %187 = math.exp %186 : vector<8x64xf32>
    %cst_39 = arith.constant 1.000000e+00 : f32
    %188 = vector.broadcast %cst_39 : f32 to vector<8x64xf32>
    %189 = arith.addf %188, %187 : vector<8x64xf32>
    %190 = arith.divf %188, %189 : vector<8x64xf32>
    %191 = vector.extract_strided_slice %190 {offsets = [0, 0], sizes = [8, 16], strides = [1, 1]} : vector<8x64xf32> to vector<8x16xf32>
    %192 = vector.extract_strided_slice %190 {offsets = [0, 16], sizes = [8, 16], strides = [1, 1]} : vector<8x64xf32> to vector<8x16xf32>
    %193 = vector.extract_strided_slice %190 {offsets = [0, 32], sizes = [8, 16], strides = [1, 1]} : vector<8x64xf32> to vector<8x16xf32>
    %cst_40 = arith.constant 2.000000e+00 : f32
    %194 = vector.broadcast %cst_40 : f32 to vector<8x16xf32>
    %195 = arith.mulf %194, %193 : vector<8x16xf32>
    %cst_41 = arith.constant 1.000000e+00 : f32
    %196 = vector.broadcast %cst_41 : f32 to vector<8x16xf32>
    %197 = arith.subf %195, %196 : vector<8x16xf32>
    %198 = vector.extract_strided_slice %190 {offsets = [0, 48], sizes = [8, 16], strides = [1, 1]} : vector<8x64xf32> to vector<8x16xf32>
    %199 = arith.mulf %192, %158 : vector<8x16xf32>
    %200 = arith.mulf %191, %197 : vector<8x16xf32>
    %201 = arith.addf %199, %200 : vector<8x16xf32>
    %202 = math.tanh %201 : vector<8x16xf32>
    %203 = arith.mulf %198, %202 : vector<8x16xf32>
    %204 = tpu.concatenate %203, %182 in 1 : vector<8x16xf32>, vector<8x16xf32> -> vector<8x32xf32>
    %cst_42 = arith.constant dense<0.000000e+00> : vector<8x128xf32>
    %205 = tpu.matmul %204, %6, %cst_42 {dimension_numbers = #tpu.dot_dimension_numbers<[1], [0], [0], [1], [0, 0, 1, 1], [], []>} : vector<8x32xf32>, vector<32x128xf32>, vector<8x128xf32> -> vector<8x128xf32>
    %206 = vector.extract_strided_slice %205 {offsets = [0, 64], sizes = [8, 64], strides = [1, 1]} : vector<8x128xf32> to vector<8x64xf32>
    %207 = arith.addf %206, %9 : vector<8x64xf32>
    %208 = arith.negf %207 : vector<8x64xf32>
    %209 = math.exp %208 : vector<8x64xf32>
    %cst_43 = arith.constant 1.000000e+00 : f32
    %210 = vector.broadcast %cst_43 : f32 to vector<8x64xf32>
    %211 = arith.addf %210, %209 : vector<8x64xf32>
    %212 = arith.divf %210, %211 : vector<8x64xf32>
    %213 = vector.extract_strided_slice %212 {offsets = [0, 0], sizes = [8, 16], strides = [1, 1]} : vector<8x64xf32> to vector<8x16xf32>
    %214 = vector.extract_strided_slice %212 {offsets = [0, 16], sizes = [8, 16], strides = [1, 1]} : vector<8x64xf32> to vector<8x16xf32>
    %215 = vector.extract_strided_slice %212 {offsets = [0, 32], sizes = [8, 16], strides = [1, 1]} : vector<8x64xf32> to vector<8x16xf32>
    %cst_44 = arith.constant 2.000000e+00 : f32
    %216 = vector.broadcast %cst_44 : f32 to vector<8x16xf32>
    %217 = arith.mulf %216, %215 : vector<8x16xf32>
    %cst_45 = arith.constant 1.000000e+00 : f32
    %218 = vector.broadcast %cst_45 : f32 to vector<8x16xf32>
    %219 = arith.subf %217, %218 : vector<8x16xf32>
    %220 = vector.extract_strided_slice %212 {offsets = [0, 48], sizes = [8, 16], strides = [1, 1]} : vector<8x64xf32> to vector<8x16xf32>
    %221 = arith.mulf %214, %180 : vector<8x16xf32>
    %222 = arith.mulf %213, %219 : vector<8x16xf32>
    %223 = arith.addf %221, %222 : vector<8x16xf32>
    %224 = math.tanh %223 : vector<8x16xf32>
    %225 = arith.mulf %220, %224 : vector<8x16xf32>
    %226 = vector.extract_strided_slice %205 {offsets = [0, 0], sizes = [8, 64], strides = [1, 1]} : vector<8x128xf32> to vector<8x64xf32>
    %227 = vector.extract_strided_slice %5 {offsets = [40, 0], sizes = [8, 64], strides = [1, 1]} : vector<64x64xf32> to vector<8x64xf32>
    %228 = arith.addf %227, %226 : vector<8x64xf32>
    %229 = arith.negf %228 : vector<8x64xf32>
    %230 = math.exp %229 : vector<8x64xf32>
    %cst_46 = arith.constant 1.000000e+00 : f32
    %231 = vector.broadcast %cst_46 : f32 to vector<8x64xf32>
    %232 = arith.addf %231, %230 : vector<8x64xf32>
    %233 = arith.divf %231, %232 : vector<8x64xf32>
    %234 = vector.extract_strided_slice %233 {offsets = [0, 0], sizes = [8, 16], strides = [1, 1]} : vector<8x64xf32> to vector<8x16xf32>
    %235 = vector.extract_strided_slice %233 {offsets = [0, 16], sizes = [8, 16], strides = [1, 1]} : vector<8x64xf32> to vector<8x16xf32>
    %236 = vector.extract_strided_slice %233 {offsets = [0, 32], sizes = [8, 16], strides = [1, 1]} : vector<8x64xf32> to vector<8x16xf32>
    %cst_47 = arith.constant 2.000000e+00 : f32
    %237 = vector.broadcast %cst_47 : f32 to vector<8x16xf32>
    %238 = arith.mulf %237, %236 : vector<8x16xf32>
    %cst_48 = arith.constant 1.000000e+00 : f32
    %239 = vector.broadcast %cst_48 : f32 to vector<8x16xf32>
    %240 = arith.subf %238, %239 : vector<8x16xf32>
    %241 = vector.extract_strided_slice %233 {offsets = [0, 48], sizes = [8, 16], strides = [1, 1]} : vector<8x64xf32> to vector<8x16xf32>
    %242 = arith.mulf %235, %201 : vector<8x16xf32>
    %243 = arith.mulf %234, %240 : vector<8x16xf32>
    %244 = arith.addf %242, %243 : vector<8x16xf32>
    %245 = math.tanh %244 : vector<8x16xf32>
    %246 = arith.mulf %241, %245 : vector<8x16xf32>
    %247 = tpu.concatenate %246, %225 in 1 : vector<8x16xf32>, vector<8x16xf32> -> vector<8x32xf32>
    %cst_49 = arith.constant dense<0.000000e+00> : vector<8x128xf32>
    %248 = tpu.matmul %247, %6, %cst_49 {dimension_numbers = #tpu.dot_dimension_numbers<[1], [0], [0], [1], [0, 0, 1, 1], [], []>} : vector<8x32xf32>, vector<32x128xf32>, vector<8x128xf32> -> vector<8x128xf32>
    %249 = vector.extract_strided_slice %248 {offsets = [0, 64], sizes = [8, 64], strides = [1, 1]} : vector<8x128xf32> to vector<8x64xf32>
    %250 = arith.addf %249, %9 : vector<8x64xf32>
    %251 = arith.negf %250 : vector<8x64xf32>
    %252 = math.exp %251 : vector<8x64xf32>
    %cst_50 = arith.constant 1.000000e+00 : f32
    %253 = vector.broadcast %cst_50 : f32 to vector<8x64xf32>
    %254 = arith.addf %253, %252 : vector<8x64xf32>
    %255 = arith.divf %253, %254 : vector<8x64xf32>
    %256 = vector.extract_strided_slice %255 {offsets = [0, 0], sizes = [8, 16], strides = [1, 1]} : vector<8x64xf32> to vector<8x16xf32>
    %257 = vector.extract_strided_slice %255 {offsets = [0, 16], sizes = [8, 16], strides = [1, 1]} : vector<8x64xf32> to vector<8x16xf32>
    %258 = vector.extract_strided_slice %255 {offsets = [0, 32], sizes = [8, 16], strides = [1, 1]} : vector<8x64xf32> to vector<8x16xf32>
    %cst_51 = arith.constant 2.000000e+00 : f32
    %259 = vector.broadcast %cst_51 : f32 to vector<8x16xf32>
    %260 = arith.mulf %259, %258 : vector<8x16xf32>
    %cst_52 = arith.constant 1.000000e+00 : f32
    %261 = vector.broadcast %cst_52 : f32 to vector<8x16xf32>
    %262 = arith.subf %260, %261 : vector<8x16xf32>
    %263 = vector.extract_strided_slice %255 {offsets = [0, 48], sizes = [8, 16], strides = [1, 1]} : vector<8x64xf32> to vector<8x16xf32>
    %264 = arith.mulf %257, %223 : vector<8x16xf32>
    %265 = arith.mulf %256, %262 : vector<8x16xf32>
    %266 = arith.addf %264, %265 : vector<8x16xf32>
    %267 = math.tanh %266 : vector<8x16xf32>
    %268 = arith.mulf %263, %267 : vector<8x16xf32>
    %269 = vector.extract_strided_slice %248 {offsets = [0, 0], sizes = [8, 64], strides = [1, 1]} : vector<8x128xf32> to vector<8x64xf32>
    %270 = vector.extract_strided_slice %5 {offsets = [48, 0], sizes = [8, 64], strides = [1, 1]} : vector<64x64xf32> to vector<8x64xf32>
    %271 = arith.addf %270, %269 : vector<8x64xf32>
    %272 = arith.negf %271 : vector<8x64xf32>
    %273 = math.exp %272 : vector<8x64xf32>
    %cst_53 = arith.constant 1.000000e+00 : f32
    %274 = vector.broadcast %cst_53 : f32 to vector<8x64xf32>
    %275 = arith.addf %274, %273 : vector<8x64xf32>
    %276 = arith.divf %274, %275 : vector<8x64xf32>
    %277 = vector.extract_strided_slice %276 {offsets = [0, 0], sizes = [8, 16], strides = [1, 1]} : vector<8x64xf32> to vector<8x16xf32>
    %278 = vector.extract_strided_slice %276 {offsets = [0, 16], sizes = [8, 16], strides = [1, 1]} : vector<8x64xf32> to vector<8x16xf32>
    %279 = vector.extract_strided_slice %276 {offsets = [0, 32], sizes = [8, 16], strides = [1, 1]} : vector<8x64xf32> to vector<8x16xf32>
    %cst_54 = arith.constant 2.000000e+00 : f32
    %280 = vector.broadcast %cst_54 : f32 to vector<8x16xf32>
    %281 = arith.mulf %280, %279 : vector<8x16xf32>
    %cst_55 = arith.constant 1.000000e+00 : f32
    %282 = vector.broadcast %cst_55 : f32 to vector<8x16xf32>
    %283 = arith.subf %281, %282 : vector<8x16xf32>
    %284 = vector.extract_strided_slice %276 {offsets = [0, 48], sizes = [8, 16], strides = [1, 1]} : vector<8x64xf32> to vector<8x16xf32>
    %285 = arith.mulf %278, %244 : vector<8x16xf32>
    %286 = arith.mulf %277, %283 : vector<8x16xf32>
    %287 = arith.addf %285, %286 : vector<8x16xf32>
    %288 = math.tanh %287 : vector<8x16xf32>
    %289 = arith.mulf %284, %288 : vector<8x16xf32>
    %290 = tpu.concatenate %289, %268 in 1 : vector<8x16xf32>, vector<8x16xf32> -> vector<8x32xf32>
    %cst_56 = arith.constant dense<0.000000e+00> : vector<8x128xf32>
    %291 = tpu.matmul %290, %6, %cst_56 {dimension_numbers = #tpu.dot_dimension_numbers<[1], [0], [0], [1], [0, 0, 1, 1], [], []>} : vector<8x32xf32>, vector<32x128xf32>, vector<8x128xf32> -> vector<8x128xf32>
    %292 = vector.extract_strided_slice %291 {offsets = [0, 64], sizes = [8, 64], strides = [1, 1]} : vector<8x128xf32> to vector<8x64xf32>
    %293 = arith.addf %292, %9 : vector<8x64xf32>
    %294 = arith.negf %293 : vector<8x64xf32>
    %295 = math.exp %294 : vector<8x64xf32>
    %cst_57 = arith.constant 1.000000e+00 : f32
    %296 = vector.broadcast %cst_57 : f32 to vector<8x64xf32>
    %297 = arith.addf %296, %295 : vector<8x64xf32>
    %298 = arith.divf %296, %297 : vector<8x64xf32>
    %299 = vector.extract_strided_slice %298 {offsets = [0, 0], sizes = [8, 16], strides = [1, 1]} : vector<8x64xf32> to vector<8x16xf32>
    %300 = vector.extract_strided_slice %298 {offsets = [0, 16], sizes = [8, 16], strides = [1, 1]} : vector<8x64xf32> to vector<8x16xf32>
    %301 = vector.extract_strided_slice %298 {offsets = [0, 32], sizes = [8, 16], strides = [1, 1]} : vector<8x64xf32> to vector<8x16xf32>
    %cst_58 = arith.constant 2.000000e+00 : f32
    %302 = vector.broadcast %cst_58 : f32 to vector<8x16xf32>
    %303 = arith.mulf %302, %301 : vector<8x16xf32>
    %cst_59 = arith.constant 1.000000e+00 : f32
    %304 = vector.broadcast %cst_59 : f32 to vector<8x16xf32>
    %305 = arith.subf %303, %304 : vector<8x16xf32>
    %306 = vector.extract_strided_slice %298 {offsets = [0, 48], sizes = [8, 16], strides = [1, 1]} : vector<8x64xf32> to vector<8x16xf32>
    %307 = arith.mulf %300, %266 : vector<8x16xf32>
    %308 = arith.mulf %299, %305 : vector<8x16xf32>
    %309 = arith.addf %307, %308 : vector<8x16xf32>
    %310 = math.tanh %309 : vector<8x16xf32>
    %311 = arith.mulf %306, %310 : vector<8x16xf32>
    %312 = vector.extract_strided_slice %291 {offsets = [0, 0], sizes = [8, 64], strides = [1, 1]} : vector<8x128xf32> to vector<8x64xf32>
    %313 = vector.extract_strided_slice %5 {offsets = [56, 0], sizes = [8, 64], strides = [1, 1]} : vector<64x64xf32> to vector<8x64xf32>
    %314 = arith.addf %313, %312 : vector<8x64xf32>
    %315 = arith.negf %314 : vector<8x64xf32>
    %316 = math.exp %315 : vector<8x64xf32>
    %cst_60 = arith.constant 1.000000e+00 : f32
    %317 = vector.broadcast %cst_60 : f32 to vector<8x64xf32>
    %318 = arith.addf %317, %316 : vector<8x64xf32>
    %319 = arith.divf %317, %318 : vector<8x64xf32>
    %320 = vector.extract_strided_slice %319 {offsets = [0, 0], sizes = [8, 16], strides = [1, 1]} : vector<8x64xf32> to vector<8x16xf32>
    %321 = vector.extract_strided_slice %319 {offsets = [0, 16], sizes = [8, 16], strides = [1, 1]} : vector<8x64xf32> to vector<8x16xf32>
    %322 = vector.extract_strided_slice %319 {offsets = [0, 32], sizes = [8, 16], strides = [1, 1]} : vector<8x64xf32> to vector<8x16xf32>
    %cst_61 = arith.constant 2.000000e+00 : f32
    %323 = vector.broadcast %cst_61 : f32 to vector<8x16xf32>
    %324 = arith.mulf %323, %322 : vector<8x16xf32>
    %cst_62 = arith.constant 1.000000e+00 : f32
    %325 = vector.broadcast %cst_62 : f32 to vector<8x16xf32>
    %326 = arith.subf %324, %325 : vector<8x16xf32>
    %327 = vector.extract_strided_slice %319 {offsets = [0, 48], sizes = [8, 16], strides = [1, 1]} : vector<8x64xf32> to vector<8x16xf32>
    %328 = arith.mulf %321, %287 : vector<8x16xf32>
    %329 = arith.mulf %320, %326 : vector<8x16xf32>
    %330 = arith.addf %328, %329 : vector<8x16xf32>
    %331 = math.tanh %330 : vector<8x16xf32>
    %332 = arith.mulf %327, %331 : vector<8x16xf32>
    %333 = tpu.concatenate %332, %311 in 1 : vector<8x16xf32>, vector<8x16xf32> -> vector<8x32xf32>
    %cst_63 = arith.constant dense<0.000000e+00> : vector<8x128xf32>
    %334 = tpu.matmul %333, %6, %cst_63 {dimension_numbers = #tpu.dot_dimension_numbers<[1], [0], [0], [1], [0, 0, 1, 1], [], []>} : vector<8x32xf32>, vector<32x128xf32>, vector<8x128xf32> -> vector<8x128xf32>
    %335 = vector.extract_strided_slice %334 {offsets = [0, 64], sizes = [8, 64], strides = [1, 1]} : vector<8x128xf32> to vector<8x64xf32>
    %336 = arith.addf %335, %9 : vector<8x64xf32>
    %337 = arith.negf %336 : vector<8x64xf32>
    %338 = math.exp %337 : vector<8x64xf32>
    %cst_64 = arith.constant 1.000000e+00 : f32
    %339 = vector.broadcast %cst_64 : f32 to vector<8x64xf32>
    %340 = arith.addf %339, %338 : vector<8x64xf32>
    %341 = arith.divf %339, %340 : vector<8x64xf32>
    %342 = vector.extract_strided_slice %341 {offsets = [0, 0], sizes = [8, 16], strides = [1, 1]} : vector<8x64xf32> to vector<8x16xf32>
    %343 = vector.extract_strided_slice %341 {offsets = [0, 16], sizes = [8, 16], strides = [1, 1]} : vector<8x64xf32> to vector<8x16xf32>
    %344 = vector.extract_strided_slice %341 {offsets = [0, 32], sizes = [8, 16], strides = [1, 1]} : vector<8x64xf32> to vector<8x16xf32>
    %cst_65 = arith.constant 2.000000e+00 : f32
    %345 = vector.broadcast %cst_65 : f32 to vector<8x16xf32>
    %346 = arith.mulf %345, %344 : vector<8x16xf32>
    %cst_66 = arith.constant 1.000000e+00 : f32
    %347 = vector.broadcast %cst_66 : f32 to vector<8x16xf32>
    %348 = arith.subf %346, %347 : vector<8x16xf32>
    %349 = vector.extract_strided_slice %341 {offsets = [0, 48], sizes = [8, 16], strides = [1, 1]} : vector<8x64xf32> to vector<8x16xf32>
    %350 = arith.mulf %343, %309 : vector<8x16xf32>
    %351 = arith.mulf %342, %348 : vector<8x16xf32>
    %352 = arith.addf %350, %351 : vector<8x16xf32>
    %353 = math.tanh %352 : vector<8x16xf32>
    %354 = arith.mulf %349, %353 : vector<8x16xf32>
    %c0_67 = arith.constant 0 : index
    %c0_68 = arith.constant 0 : index
    %355 = vector.load %arg5[%c0_67, %c0_68] : memref<16x2xf32, #tpu.memory_space<vmem>>, vector<16x2xf32>
    %cst_69 = arith.constant dense<0.000000e+00> : vector<8x2xf32>
    %356 = tpu.matmul %354, %355, %cst_69 {dimension_numbers = #tpu.dot_dimension_numbers<[1], [0], [0], [1], [0, 0, 1, 1], [], []>} : vector<8x16xf32>, vector<16x2xf32>, vector<8x2xf32> -> vector<8x2xf32>
    %c0_70 = arith.constant 0 : index
    %c0_71 = arith.constant 0 : index
    %357 = vector.load %arg6[%c0_70, %c0_71] : memref<1x2xf32, #tpu.memory_space<vmem>>, vector<1x2xf32>
    %358 = vector.broadcast %357 : vector<1x2xf32> to vector<8x2xf32>
    %359 = arith.addf %356, %358 : vector<8x2xf32>
    %360 = vector.extract_strided_slice %359 {offsets = [0, 0], sizes = [2, 2], strides = [1, 1]} : vector<8x2xf32> to vector<2x2xf32>
    %c0_72 = arith.constant 0 : index
    %c0_73 = arith.constant 0 : index
    %361 = vector.load %arg7[%c0_72, %c0_73] : memref<2x2xf32, #tpu.memory_space<vmem>>, vector<2x2xf32>
    tpu.vector_store %arg7[%c0_72, %c0_73], %360 {strides = array<i32>} : memref<2x2xf32, #tpu.memory_space<vmem>>, vector<2x2xf32>,
    return
  }
}

</mosaic_0001>

<llo_original>
// kernel: lstm_forward.1
$region0: #{lstm_forward.1}
  #allocation0 [shape = 'u32[]', space=smem, size = 0x4, offset = 0x4, fixed_abs, tag = 'smem constant byte address 0x4 - core index']
  #allocation1 [shape = 'u32[72,128]{1,0:T(1,128)}', space=vmem, size = 0x9000, scoped, tag = 'internal scratch']
  %s0 = inlined_call_operand.vmem [shape: f32[64,64], index: 0, kind: input, shape index: {}]
  %s1 = inlined_call_operand.vmem [shape: f32[64,64], index: 1, kind: input, shape index: {}]
  %s2 = inlined_call_operand.vmem [shape: f32[1,64], index: 2, kind: input, shape index: {}]
  %s3 = inlined_call_operand.vmem [shape: f32[32,128], index: 3, kind: input, shape index: {}]
  %s4 = inlined_call_operand.vmem [shape: f32[1,64], index: 4, kind: input, shape index: {}]
  %s5 = inlined_call_operand.vmem [shape: f32[16,2], index: 5, kind: input, shape index: {}]
  %s6 = inlined_call_operand.vmem [shape: f32[1,2], index: 6, kind: input, shape index: {}]
  %s7 = inlined_call_operand.hbm [shape: f32[2,2], index: 7, kind: output, shape index: {}]
  %s8 = sld [smem:[#allocation0]]
  $region38: #{lstm_forward.1} parent=0
    _
  %s10 = ssub.s32 1, %s8
  %s11 = scalar_select 0, %s10, %s8
  $region1: #{lstm_forward.1} parent=0
    #allocation2 [shape = 'u8[1024]{0}', space=vmem, size = 0x400, scoped, tag = 'output window, operand 0, single buffered']
    #allocation3 [shape = 's32[1]{0}', space=sflag, size = 0x4, scoped, tag = 'scoped memory for lstm_forward.1']
    %12 = vsyncpa [#allocation3], 0
    // Predicated region
    $region2: #{lstm_forward.1} parent=1 // pred_check
      _
    $region3: #{lstm_forward.1} parent=1 // pred_check_branch
      %14 = sbr.rel (0) target = $region5
    $region4: #{lstm_forward.1} parent=1 // pred_region
      _
    $region5: #{lstm_forward.1} parent=1 // pred_fallthru
      _
    // Predicated region
    $region6: #{lstm_forward.1} parent=1 // pred_check
      _
    $region7: #{lstm_forward.1} parent=1 // pred_check_branch
      %16 = sbr.rel (0) target = $region9
    $region8: #{lstm_forward.1} parent=1 // pred_region
      _
    $region9: #{lstm_forward.1} parent=1 // pred_fallthru
      _
    // Predicated region
    $region10: #{lstm_forward.1} parent=1 // pred_check
      _
    $region11: #{lstm_forward.1} parent=1 // pred_check_branch
      %18 = sbr.rel (0) target = $region13
    $region12: #{lstm_forward.1} parent=1 // pred_region
      _
    $region13: #{lstm_forward.1} parent=1 // pred_fallthru
      _
    // Predicated region
    $region14: #{lstm_forward.1} parent=1 // pred_check
      _
    $region15: #{lstm_forward.1} parent=1 // pred_check_branch
      %20 = sbr.rel (0) target = $region17
    $region16: #{lstm_forward.1} parent=1 // pred_region
      _
    $region17: #{lstm_forward.1} parent=1 // pred_fallthru
      _
    // Predicated region
    $region18: #{lstm_forward.1} parent=1 // pred_check
      _
    $region19: #{lstm_forward.1} parent=1 // pred_check_branch
      %22 = sbr.rel (0) target = $region21
    $region20: #{lstm_forward.1} parent=1 // pred_region
      _
    $region21: #{lstm_forward.1} parent=1 // pred_fallthru
      _
    // Predicated region
    $region22: #{lstm_forward.1} parent=1 // pred_check
      _
    $region23: #{lstm_forward.1} parent=1 // pred_check_branch
      %24 = sbr.rel (0) target = $region25
    $region24: #{lstm_forward.1} parent=1 // pred_region
      _
    $region25: #{lstm_forward.1} parent=1 // pred_fallthru
      _
    // Predicated region
    $region26: #{lstm_forward.1} parent=1 // pred_check
      _
    $region27: #{lstm_forward.1} parent=1 // pred_check_branch
      %26 = sbr.rel (0) target = $region29
    $region28: #{lstm_forward.1} parent=1 // pred_region
      _
    $region29: #{lstm_forward.1} parent=1 // pred_fallthru
      _
    %v27 = vld [vmem:[%s0] sm:$0xff]
    %v28 = vld [vmem:[%s0 + $0x8] sm:$0xff]
    %v29 = vld [vmem:[%s0 + $0x10] sm:$0xff]
    %v30 = vld [vmem:[%s0 + $0x18] sm:$0xff]
    %v31 = vld [vmem:[%s0 + $0x20] sm:$0xff]
    %v32 = vld [vmem:[%s0 + $0x28] sm:$0xff]
    %v33 = vld [vmem:[%s0 + $0x30] sm:$0xff]
    %v34 = vld [vmem:[%s0 + $0x38] sm:$0xff]
    %v35 = vld [vmem:[%s1] sm:$0xff]
    %v36 = vld [vmem:[%s1 + $0x8] sm:$0xff]
    %v37 = vld [vmem:[%s1 + $0x10] sm:$0xff]
    %v38 = vld [vmem:[%s1 + $0x18] sm:$0xff]
    %v39 = vld [vmem:[%s1 + $0x20] sm:$0xff]
    %v40 = vld [vmem:[%s1 + $0x28] sm:$0xff]
    %v41 = vld [vmem:[%s1 + $0x30] sm:$0xff]
    %v42 = vld [vmem:[%s1 + $0x38] sm:$0xff]
    %v43 = vld [vmem:[%s2] sm:$0x1]
    %v45 = vperm.slane %v43, 0
    %vm47 = vcmask 523264
    %v49 = vsel %vm47, %v27, 0
    %v52 = vsel %vm47, %v28, 0
    %v55 = vsel %vm47, %v29, 0
    %v58 = vsel %vm47, %v30, 0
    %v61 = vsel %vm47, %v31, 0
    %v64 = vsel %vm47, %v32, 0
    %v67 = vsel %vm47, %v33, 0
    %v70 = vsel %vm47, %v34, 0
    %72 = vmatpush.msra.mxu0 0.0
    %73 = vmatpush.msra.mxu0 0.0
    %74 = vmatpush.msra.mxu0 0.0
    %75 = vmatpush.msra.mxu0 0.0
    %76 = vmatpush.msra.mxu0 0.0
    %77 = vmatpush.msra.mxu0 0.0
    %78 = vmatpush.msra.mxu0 0.0
    %79 = vmatpush.msra.mxu0 0.0
    %80 = vmatpush.msra.mxu0 %v42
    %81 = vmatpush.msra.mxu0 %v41
    %82 = vmatpush.msra.mxu0 %v40
    %83 = vmatpush.msra.mxu0 %v39
    %84 = vmatpush.msra.mxu0 %v38
    %85 = vmatpush.msra.mxu0 %v37
    %86 = vmatpush.msra.mxu0 %v36
    %87 = vmatpush.msra.mxu0 %v35
    %88 = vmatmul.f32.gmra.mxu0 %v49
    %v89 = vpop.f32.mrf.mxu0
    %v90 = vadd.f32 %v45, %v89
    %91 = vmatmul.f32.gmra.mxu0 %v52
    %v92 = vpop.f32.mrf.mxu0
    %v93 = vadd.f32 %v45, %v92
    %94 = vmatmul.f32.gmra.mxu0 %v55
    %v95 = vpop.f32.mrf.mxu0
    %v96 = vadd.f32 %v45, %v95
    %97 = vmatmul.f32.gmra.mxu0 %v58
    %v98 = vpop.f32.mrf.mxu0
    %v99 = vadd.f32 %v45, %v98
    %100 = vmatmul.f32.gmra.mxu0 %v61
    %v101 = vpop.f32.mrf.mxu0
    %v102 = vadd.f32 %v45, %v101
    %103 = vmatmul.f32.gmra.mxu0 %v64
    %v104 = vpop.f32.mrf.mxu0
    %v105 = vadd.f32 %v45, %v104
    %106 = vmatmul.f32.gmra.mxu0 %v67
    %v107 = vpop.f32.mrf.mxu0
    %v108 = vadd.f32 %v45, %v107
    %109 = vmatmul.f32.gmra.mxu0 %v70
    %v110 = vpop.f32.mrf.mxu0
    %v111 = vadd.f32 %v45, %v110
    %112 = vdwg.mxu0
    %v113 = vld [vmem:[%s3] sm:$0xff]
    %v114 = vld [vmem:[%s3 + $0x8] sm:$0xff]
    %v115 = vld [vmem:[%s3 + $0x10] sm:$0xff]
    %v116 = vld [vmem:[%s3 + $0x18] sm:$0xff]
    %v117 = vld [vmem:[%s4] sm:$0x1]
    %v119 = vperm.slane %v117, 0
    %v120 = vadd.f32 %v90, 0.0
    %v121 = vxor.u32 %v120, 2147483648
    %v122 = vmul.f32 %v121, 1.442695
    %v123 = vpow.pop %v122
    %v124 = vadd.f32 %v123, 1.0
    %v125 = vrcp.pop %v124
    %v126 = vmul.f32 %v124, %v125
    %v127 = vsub.f32 1.0, %v126
    %v128 = vmul.f32 %v125, %v127
    %v129 = vadd.f32 %v125, %v128
    %vm130 = vweird.f32 %v124
    %vm131 = vweird.f32 %v125
    %vm132 = vmor %vm130, %vm131
    %v133 = vsel %vm132, %v125, %v129
    %v134 = vand.u32 2147483647, %v124
    %vm135 = vcmp.eq.f32.partialorder %v134, 8.507059e+37
    %v136 = vand.u32 %v124, 2147483648
    %v137 = vor.u32 1.1754944e-38, %v136
    %v138 = vsel %vm135, %v137, %v133
    %v139 = vmul.f32 1.0, %v138
    %v140 = vmul.f32 %v139, 2.0
    %v141 = vsub.f32 %v140, 1.0
    %v142 = vmul.f32 %v139, 0.0
    %144 = vrot.lane.b32.xlu0 %v141, 96
    %v145 = vpop.permute.xlu0 %144
    %v147 = vmul.f32 %v139, %v145
    %149 = vrot.lane.b32.xlu0 %v147, 16
    %v150 = vpop.permute.xlu0 %149
    %v152 = vadd.f32 %v142, %v150
    %v153 = vtanh.pop %v152
    %155 = vrot.lane.b32.xlu0 %v153, 32
    %v156 = vpop.permute.xlu0 %155
    %v158 = vmul.f32 %v139, %v156
    %160 = vrot.lane.b32.xlu0 %v158, 80
    %v161 = vpop.permute.xlu0 %160
    %vm163 = vcmask 130048
    %v164 = vsel %vm163, %v161, 0.0
    %vm165 = vcmask 261120
    %v167 = vsel %vm165, %v164, 0
    %169 = vmatpush.msra.mxu0 0.0
    %170 = vmatpush.msra.mxu0 0.0
    %171 = vmatpush.msra.mxu0 0.0
    %172 = vmatpush.msra.mxu0 0.0
    %173 = vmatpush.msra.mxu0 0.0
    %174 = vmatpush.msra.mxu0 0.0
    %175 = vmatpush.msra.mxu0 0.0
    %176 = vmatpush.msra.mxu0 0.0
    %177 = vmatpush.msra.mxu0 0.0
    %178 = vmatpush.msra.mxu0 0.0
    %179 = vmatpush.msra.mxu0 0.0
    %180 = vmatpush.msra.mxu0 0.0
    %181 = vmatpush.msra.mxu0 %v116
    %182 = vmatpush.msra.mxu0 %v115
    %183 = vmatpush.msra.mxu0 %v114
    %184 = vmatpush.msra.mxu0 %v113
    %185 = vmatmul.f32.gmra.mxu0 %v167
    %v186 = vpop.f32.mrf.mxu0
    %v187 = vadd.f32 0.0, %v186
    %188 = vdwg.mxu0
    %189 = vrot.lane.b32.xlu0 %v119, 64
    %v190 = vpop.permute.xlu0 %189
    %v192 = vadd.f32 %v187, %v190
    %v193 = vxor.u32 %v192, 2147483648
    %v194 = vmul.f32 %v193, 1.442695
    %v195 = vpow.pop %v194
    %v196 = vadd.f32 %v195, 1.0
    %v197 = vrcp.pop %v196
    %v198 = vmul.f32 %v196, %v197
    %v199 = vsub.f32 1.0, %v198
    %v200 = vmul.f32 %v197, %v199
    %v201 = vadd.f32 %v197, %v200
    %vm202 = vweird.f32 %v196
    %vm203 = vweird.f32 %v197
    %vm204 = vmor %vm202, %vm203
    %v205 = vsel %vm204, %v197, %v201
    %v206 = vand.u32 2147483647, %v196
    %vm207 = vcmp.eq.f32.partialorder %v206, 8.507059e+37
    %v208 = vand.u32 %v196, 2147483648
    %v209 = vor.u32 1.1754944e-38, %v208
    %v210 = vsel %vm207, %v209, %v205
    %v211 = vmul.f32 1.0, %v210
    %v212 = vmul.f32 %v211, 2.0
    %v213 = vsub.f32 %v212, 1.0
    %v214 = vmul.f32 %v211, 0.0
    %216 = vrot.lane.b32.xlu0 %v213, 96
    %v217 = vpop.permute.xlu0 %216
    %v219 = vmul.f32 %v211, %v217
    %221 = vrot.lane.b32.xlu0 %v219, 16
    %v222 = vpop.permute.xlu0 %221
    %v224 = vadd.f32 %v214, %v222
    %v225 = vtanh.pop %v224
    %227 = vrot.lane.b32.xlu0 %v225, 32
    %v228 = vpop.permute.xlu0 %227
    %v230 = vmul.f32 %v211, %v228
    %v231 = vadd.f32 %v93, %v187
    %v232 = vxor.u32 %v231, 2147483648
    %v233 = vmul.f32 %v232, 1.442695
    %v234 = vpow.pop %v233
    %v235 = vadd.f32 %v234, 1.0
    %v236 = vrcp.pop %v235
    %v237 = vmul.f32 %v235, %v236
    %v238 = vsub.f32 1.0, %v237
    %v239 = vmul.f32 %v236, %v238
    %v240 = vadd.f32 %v236, %v239
    %vm241 = vweird.f32 %v235
    %vm242 = vweird.f32 %v236
    %vm243 = vmor %vm241, %vm242
    %v244 = vsel %vm243, %v236, %v240
    %v245 = vand.u32 2147483647, %v235
    %vm246 = vcmp.eq.f32.partialorder %v245, 8.507059e+37
    %v247 = vand.u32 %v235, 2147483648
    %v248 = vor.u32 1.1754944e-38, %v247
    %v249 = vsel %vm246, %v248, %v244
    %v250 = vmul.f32 1.0, %v249
    %v251 = vmul.f32 %v250, 2.0
    %v252 = vsub.f32 %v251, 1.0
    %v253 = vmul.f32 %v250, %v152
    %255 = vrot.lane.b32.xlu0 %v252, 96
    %v256 = vpop.permute.xlu0 %255
    %v258 = vmul.f32 %v250, %v256
    %260 = vrot.lane.b32.xlu0 %v258, 16
    %v261 = vpop.permute.xlu0 %260
    %v263 = vadd.f32 %v253, %v261
    %v264 = vtanh.pop %v263
    %266 = vrot.lane.b32.xlu0 %v264, 32
    %v267 = vpop.permute.xlu0 %266
    %v269 = vmul.f32 %v250, %v267
    %271 = vrot.lane.b32.xlu0 %v269, 80
    %v272 = vpop.permute.xlu0 %271
    %275 = vrot.lane.b32.xlu0 %v230, 32
    %v276 = vpop.permute.xlu0 %275
    %v278 = vsel %vm163, %v272, %v276
    %v280 = vsel %vm165, %v278, 0
    %282 = vmatpush.msra.mxu0 0.0
    %283 = vmatpush.msra.mxu0 0.0
    %284 = vmatpush.msra.mxu0 0.0
    %285 = vmatpush.msra.mxu0 0.0
    %286 = vmatpush.msra.mxu0 0.0
    %287 = vmatpush.msra.mxu0 0.0
    %288 = vmatpush.msra.mxu0 0.0
    %289 = vmatpush.msra.mxu0 0.0
    %290 = vmatpush.msra.mxu0 0.0
    %291 = vmatpush.msra.mxu0 0.0
    %292 = vmatpush.msra.mxu0 0.0
    %293 = vmatpush.msra.mxu0 0.0
    %294 = vmatpush.msra.mxu0 %v116
    %295 = vmatpush.msra.mxu0 %v115
    %296 = vmatpush.msra.mxu0 %v114
    %297 = vmatpush.msra.mxu0 %v113
    %298 = vmatmul.f32.gmra.mxu0 %v280
    %v299 = vpop.f32.mrf.mxu0
    %v300 = vadd.f32 0.0, %v299
    %301 = vdwg.mxu0
    %v302 = vadd.f32 %v300, %v190
    %v303 = vxor.u32 %v302, 2147483648
    %v304 = vmul.f32 %v303, 1.442695
    %v305 = vpow.pop %v304
    %v306 = vadd.f32 %v305, 1.0
    %v307 = vrcp.pop %v306
    %v308 = vmul.f32 %v306, %v307
    %v309 = vsub.f32 1.0, %v308
    %v310 = vmul.f32 %v307, %v309
    %v311 = vadd.f32 %v307, %v310
    %vm312 = vweird.f32 %v306
    %vm313 = vweird.f32 %v307
    %vm314 = vmor %vm312, %vm313
    %v315 = vsel %vm314, %v307, %v311
    %v316 = vand.u32 2147483647, %v306
    %vm317 = vcmp.eq.f32.partialorder %v316, 8.507059e+37
    %v318 = vand.u32 %v306, 2147483648
    %v319 = vor.u32 1.1754944e-38, %v318
    %v320 = vsel %vm317, %v319, %v315
    %v321 = vmul.f32 1.0, %v320
    %v322 = vmul.f32 %v321, 2.0
    %v323 = vsub.f32 %v322, 1.0
    %v324 = vmul.f32 %v321, %v224
    %326 = vrot.lane.b32.xlu0 %v323, 96
    %v327 = vpop.permute.xlu0 %326
    %v329 = vmul.f32 %v321, %v327
    %331 = vrot.lane.b32.xlu0 %v329, 16
    %v332 = vpop.permute.xlu0 %331
    %v334 = vadd.f32 %v324, %v332
    %v335 = vtanh.pop %v334
    %337 = vrot.lane.b32.xlu0 %v335, 32
    %v338 = vpop.permute.xlu0 %337
    %v340 = vmul.f32 %v321, %v338
    %v341 = vadd.f32 %v96, %v300
    %v342 = vxor.u32 %v341, 2147483648
    %v343 = vmul.f32 %v342, 1.442695
    %v344 = vpow.pop %v343
    %v345 = vadd.f32 %v344, 1.0
    %v346 = vrcp.pop %v345
    %v347 = vmul.f32 %v345, %v346
    %v348 = vsub.f32 1.0, %v347
    %v349 = vmul.f32 %v346, %v348
    %v350 = vadd.f32 %v346, %v349
    %vm351 = vweird.f32 %v345
    %vm352 = vweird.f32 %v346
    %vm353 = vmor %vm351, %vm352
    %v354 = vsel %vm353, %v346, %v350
    %v355 = vand.u32 2147483647, %v345
    %vm356 = vcmp.eq.f32.partialorder %v355, 8.507059e+37
    %v357 = vand.u32 %v345, 2147483648
    %v358 = vor.u32 1.1754944e-38, %v357
    %v359 = vsel %vm356, %v358, %v354
    %v360 = vmul.f32 1.0, %v359
    %v361 = vmul.f32 %v360, 2.0
    %v362 = vsub.f32 %v361, 1.0
    %v363 = vmul.f32 %v360, %v263
    %365 = vrot.lane.b32.xlu0 %v362, 96
    %v366 = vpop.permute.xlu0 %365
    %v368 = vmul.f32 %v360, %v366
    %370 = vrot.lane.b32.xlu0 %v368, 16
    %v371 = vpop.permute.xlu0 %370
    %v373 = vadd.f32 %v363, %v371
    %v374 = vtanh.pop %v373
    %376 = vrot.lane.b32.xlu0 %v374, 32
    %v377 = vpop.permute.xlu0 %376
    %v379 = vmul.f32 %v360, %v377
    %381 = vrot.lane.b32.xlu0 %v379, 80
    %v382 = vpop.permute.xlu0 %381
    %385 = vrot.lane.b32.xlu0 %v340, 32
    %v386 = vpop.permute.xlu0 %385
    %v388 = vsel %vm163, %v382, %v386
    %v390 = vsel %vm165, %v388, 0
    %392 = vmatpush.msra.mxu0 0.0
    %393 = vmatpush.msra.mxu0 0.0
    %394 = vmatpush.msra.mxu0 0.0
    %395 = vmatpush.msra.mxu0 0.0
    %396 = vmatpush.msra.mxu0 0.0
    %397 = vmatpush.msra.mxu0 0.0
    %398 = vmatpush.msra.mxu0 0.0
    %399 = vmatpush.msra.mxu0 0.0
    %400 = vmatpush.msra.mxu0 0.0
    %401 = vmatpush.msra.mxu0 0.0
    %402 = vmatpush.msra.mxu0 0.0
    %403 = vmatpush.msra.mxu0 0.0
    %404 = vmatpush.msra.mxu0 %v116
    %405 = vmatpush.msra.mxu0 %v115
    %406 = vmatpush.msra.mxu0 %v114
    %407 = vmatpush.msra.mxu0 %v113
    %408 = vmatmul.f32.gmra.mxu0 %v390
    %v409 = vpop.f32.mrf.mxu0
    %v410 = vadd.f32 0.0, %v409
    %411 = vdwg.mxu0
    %v412 = vadd.f32 %v410, %v190
    %v413 = vxor.u32 %v412, 2147483648
    %v414 = vmul.f32 %v413, 1.442695
    %v415 = vpow.pop %v414
    %v416 = vadd.f32 %v415, 1.0
    %v417 = vrcp.pop %v416
    %v418 = vmul.f32 %v416, %v417
    %v419 = vsub.f32 1.0, %v418
    %v420 = vmul.f32 %v417, %v419
    %v421 = vadd.f32 %v417, %v420
    %vm422 = vweird.f32 %v416
    %vm423 = vweird.f32 %v417
    %vm424 = vmor %vm422, %vm423
    %v425 = vsel %vm424, %v417, %v421
    %v426 = vand.u32 2147483647, %v416
    %vm427 = vcmp.eq.f32.partialorder %v426, 8.507059e+37
    %v428 = vand.u32 %v416, 2147483648
    %v429 = vor.u32 1.1754944e-38, %v428
    %v430 = vsel %vm427, %v429, %v425
    %v431 = vmul.f32 1.0, %v430
    %v432 = vmul.f32 %v431, 2.0
    %v433 = vsub.f32 %v432, 1.0
    %v434 = vmul.f32 %v431, %v334
    %436 = vrot.lane.b32.xlu0 %v433, 96
    %v437 = vpop.permute.xlu0 %436
    %v439 = vmul.f32 %v431, %v437
    %441 = vrot.lane.b32.xlu0 %v439, 16
    %v442 = vpop.permute.xlu0 %441
    %v444 = vadd.f32 %v434, %v442
    %v445 = vtanh.pop %v444
    %447 = vrot.lane.b32.xlu0 %v445, 32
    %v448 = vpop.permute.xlu0 %447
    %v450 = vmul.f32 %v431, %v448
    %v451 = vadd.f32 %v99, %v410
    %v452 = vxor.u32 %v451, 2147483648
    %v453 = vmul.f32 %v452, 1.442695
    %v454 = vpow.pop %v453
    %v455 = vadd.f32 %v454, 1.0
    %v456 = vrcp.pop %v455
    %v457 = vmul.f32 %v455, %v456
    %v458 = vsub.f32 1.0, %v457
    %v459 = vmul.f32 %v456, %v458
    %v460 = vadd.f32 %v456, %v459
    %vm461 = vweird.f32 %v455
    %vm462 = vweird.f32 %v456
    %vm463 = vmor %vm461, %vm462
    %v464 = vsel %vm463, %v456, %v460
    %v465 = vand.u32 2147483647, %v455
    %vm466 = vcmp.eq.f32.partialorder %v465, 8.507059e+37
    %v467 = vand.u32 %v455, 2147483648
    %v468 = vor.u32 1.1754944e-38, %v467
    %v469 = vsel %vm466, %v468, %v464
    %v470 = vmul.f32 1.0, %v469
    %v471 = vmul.f32 %v470, 2.0
    %v472 = vsub.f32 %v471, 1.0
    %v473 = vmul.f32 %v470, %v373
    %475 = vrot.lane.b32.xlu0 %v472, 96
    %v476 = vpop.permute.xlu0 %475
    %v478 = vmul.f32 %v470, %v476
    %480 = vrot.lane.b32.xlu0 %v478, 16
    %v481 = vpop.permute.xlu0 %480
    %v483 = vadd.f32 %v473, %v481
    %v484 = vtanh.pop %v483
    %486 = vrot.lane.b32.xlu0 %v484, 32
    %v487 = vpop.permute.xlu0 %486
    %v489 = vmul.f32 %v470, %v487
    %491 = vrot.lane.b32.xlu0 %v489, 80
    %v492 = vpop.permute.xlu0 %491
    %495 = vrot.lane.b32.xlu0 %v450, 32
    %v496 = vpop.permute.xlu0 %495
    %v498 = vsel %vm163, %v492, %v496
    %v500 = vsel %vm165, %v498, 0
    %502 = vmatpush.msra.mxu0 0.0
    %503 = vmatpush.msra.mxu0 0.0
    %504 = vmatpush.msra.mxu0 0.0
    %505 = vmatpush.msra.mxu0 0.0
    %506 = vmatpush.msra.mxu0 0.0
    %507 = vmatpush.msra.mxu0 0.0
    %508 = vmatpush.msra.mxu0 0.0
    %509 = vmatpush.msra.mxu0 0.0
    %510 = vmatpush.msra.mxu0 0.0
    %511 = vmatpush.msra.mxu0 0.0
    %512 = vmatpush.msra.mxu0 0.0
    %513 = vmatpush.msra.mxu0 0.0
    %514 = vmatpush.msra.mxu0 %v116
    %515 = vmatpush.msra.mxu0 %v115
    %516 = vmatpush.msra.mxu0 %v114
    %517 = vmatpush.msra.mxu0 %v113
    %518 = vmatmul.f32.gmra.mxu0 %v500
    %v519 = vpop.f32.mrf.mxu0
    %v520 = vadd.f32 0.0, %v519
    %521 = vdwg.mxu0
    %v522 = vadd.f32 %v520, %v190
    %v523 = vxor.u32 %v522, 2147483648
    %v524 = vmul.f32 %v523, 1.442695
    %v525 = vpow.pop %v524
    %v526 = vadd.f32 %v525, 1.0
    %v527 = vrcp.pop %v526
    %v528 = vmul.f32 %v526, %v527
    %v529 = vsub.f32 1.0, %v528
    %v530 = vmul.f32 %v527, %v529
    %v531 = vadd.f32 %v527, %v530
    %vm532 = vweird.f32 %v526
    %vm533 = vweird.f32 %v527
    %vm534 = vmor %vm532, %vm533
    %v535 = vsel %vm534, %v527, %v531
    %v536 = vand.u32 2147483647, %v526
    %vm537 = vcmp.eq.f32.partialorder %v536, 8.507059e+37
    %v538 = vand.u32 %v526, 2147483648
    %v539 = vor.u32 1.1754944e-38, %v538
    %v540 = vsel %vm537, %v539, %v535
    %v541 = vmul.f32 1.0, %v540
    %v542 = vmul.f32 %v541, 2.0
    %v543 = vsub.f32 %v542, 1.0
    %v544 = vmul.f32 %v541, %v444
    %546 = vrot.lane.b32.xlu0 %v543, 96
    %v547 = vpop.permute.xlu0 %546
    %v549 = vmul.f32 %v541, %v547
    %551 = vrot.lane.b32.xlu0 %v549, 16
    %v552 = vpop.permute.xlu0 %551
    %v554 = vadd.f32 %v544, %v552
    %v555 = vtanh.pop %v554
    %557 = vrot.lane.b32.xlu0 %v555, 32
    %v558 = vpop.permute.xlu0 %557
    %v560 = vmul.f32 %v541, %v558
    %v561 = vadd.f32 %v102, %v520
    %v562 = vxor.u32 %v561, 2147483648
    %v563 = vmul.f32 %v562, 1.442695
    %v564 = vpow.pop %v563
    %v565 = vadd.f32 %v564, 1.0
    %v566 = vrcp.pop %v565
    %v567 = vmul.f32 %v565, %v566
    %v568 = vsub.f32 1.0, %v567
    %v569 = vmul.f32 %v566, %v568
    %v570 = vadd.f32 %v566, %v569
    %vm571 = vweird.f32 %v565
    %vm572 = vweird.f32 %v566
    %vm573 = vmor %vm571, %vm572
    %v574 = vsel %vm573, %v566, %v570
    %v575 = vand.u32 2147483647, %v565
    %vm576 = vcmp.eq.f32.partialorder %v575, 8.507059e+37
    %v577 = vand.u32 %v565, 2147483648
    %v578 = vor.u32 1.1754944e-38, %v577
    %v579 = vsel %vm576, %v578, %v574
    %v580 = vmul.f32 1.0, %v579
    %v581 = vmul.f32 %v580, 2.0
    %v582 = vsub.f32 %v581, 1.0
    %v583 = vmul.f32 %v580, %v483
    %585 = vrot.lane.b32.xlu0 %v582, 96
    %v586 = vpop.permute.xlu0 %585
    %v588 = vmul.f32 %v580, %v586
    %590 = vrot.lane.b32.xlu0 %v588, 16
    %v591 = vpop.permute.xlu0 %590
    %v593 = vadd.f32 %v583, %v591
    %v594 = vtanh.pop %v593
    %596 = vrot.lane.b32.xlu0 %v594, 32
    %v597 = vpop.permute.xlu0 %596
    %v599 = vmul.f32 %v580, %v597
    %601 = vrot.lane.b32.xlu0 %v599, 80
    %v602 = vpop.permute.xlu0 %601
    %605 = vrot.lane.b32.xlu0 %v560, 32
    %v606 = vpop.permute.xlu0 %605
    %v608 = vsel %vm163, %v602, %v606
    %v610 = vsel %vm165, %v608, 0
    %612 = vmatpush.msra.mxu0 0.0
    %613 = vmatpush.msra.mxu0 0.0
    %614 = vmatpush.msra.mxu0 0.0
    %615 = vmatpush.msra.mxu0 0.0
    %616 = vmatpush.msra.mxu0 0.0
    %617 = vmatpush.msra.mxu0 0.0
    %618 = vmatpush.msra.mxu0 0.0
    %619 = vmatpush.msra.mxu0 0.0
    %620 = vmatpush.msra.mxu0 0.0
    %621 = vmatpush.msra.mxu0 0.0
    %622 = vmatpush.msra.mxu0 0.0
    %623 = vmatpush.msra.mxu0 0.0
    %624 = vmatpush.msra.mxu0 %v116
    %625 = vmatpush.msra.mxu0 %v115
    %626 = vmatpush.msra.mxu0 %v114
    %627 = vmatpush.msra.mxu0 %v113
    %628 = vmatmul.f32.gmra.mxu0 %v610
    %v629 = vpop.f32.mrf.mxu0
    %v630 = vadd.f32 0.0, %v629
    %631 = vdwg.mxu0
    %v632 = vadd.f32 %v630, %v190
    %v633 = vxor.u32 %v632, 2147483648
    %v634 = vmul.f32 %v633, 1.442695
    %v635 = vpow.pop %v634
    %v636 = vadd.f32 %v635, 1.0
    %v637 = vrcp.pop %v636
    %v638 = vmul.f32 %v636, %v637
    %v639 = vsub.f32 1.0, %v638
    %v640 = vmul.f32 %v637, %v639
    %v641 = vadd.f32 %v637, %v640
    %vm642 = vweird.f32 %v636
    %vm643 = vweird.f32 %v637
    %vm644 = vmor %vm642, %vm643
    %v645 = vsel %vm644, %v637, %v641
    %v646 = vand.u32 2147483647, %v636
    %vm647 = vcmp.eq.f32.partialorder %v646, 8.507059e+37
    %v648 = vand.u32 %v636, 2147483648
    %v649 = vor.u32 1.1754944e-38, %v648
    %v650 = vsel %vm647, %v649, %v645
    %v651 = vmul.f32 1.0, %v650
    %v652 = vmul.f32 %v651, 2.0
    %v653 = vsub.f32 %v652, 1.0
    %v654 = vmul.f32 %v651, %v554
    %656 = vrot.lane.b32.xlu0 %v653, 96
    %v657 = vpop.permute.xlu0 %656
    %v659 = vmul.f32 %v651, %v657
    %661 = vrot.lane.b32.xlu0 %v659, 16
    %v662 = vpop.permute.xlu0 %661
    %v664 = vadd.f32 %v654, %v662
    %v665 = vtanh.pop %v664
    %667 = vrot.lane.b32.xlu0 %v665, 32
    %v668 = vpop.permute.xlu0 %667
    %v670 = vmul.f32 %v651, %v668
    %v671 = vadd.f32 %v105, %v630
    %v672 = vxor.u32 %v671, 2147483648
    %v673 = vmul.f32 %v672, 1.442695
    %v674 = vpow.pop %v673
    %v675 = vadd.f32 %v674, 1.0
    %v676 = vrcp.pop %v675
    %v677 = vmul.f32 %v675, %v676
    %v678 = vsub.f32 1.0, %v677
    %v679 = vmul.f32 %v676, %v678
    %v680 = vadd.f32 %v676, %v679
    %vm681 = vweird.f32 %v675
    %vm682 = vweird.f32 %v676
    %vm683 = vmor %vm681, %vm682
    %v684 = vsel %vm683, %v676, %v680
    %v685 = vand.u32 2147483647, %v675
    %vm686 = vcmp.eq.f32.partialorder %v685, 8.507059e+37
    %v687 = vand.u32 %v675, 2147483648
    %v688 = vor.u32 1.1754944e-38, %v687
    %v689 = vsel %vm686, %v688, %v684
    %v690 = vmul.f32 1.0, %v689
    %v691 = vmul.f32 %v690, 2.0
    %v692 = vsub.f32 %v691, 1.0
    %v693 = vmul.f32 %v690, %v593
    %695 = vrot.lane.b32.xlu0 %v692, 96
    %v696 = vpop.permute.xlu0 %695
    %v698 = vmul.f32 %v690, %v696
    %700 = vrot.lane.b32.xlu0 %v698, 16
    %v701 = vpop.permute.xlu0 %700
    %v703 = vadd.f32 %v693, %v701
    %v704 = vtanh.pop %v703
    %706 = vrot.lane.b32.xlu0 %v704, 32
    %v707 = vpop.permute.xlu0 %706
    %v709 = vmul.f32 %v690, %v707
    %711 = vrot.lane.b32.xlu0 %v709, 80
    %v712 = vpop.permute.xlu0 %711
    %715 = vrot.lane.b32.xlu0 %v670, 32
    %v716 = vpop.permute.xlu0 %715
    %v718 = vsel %vm163, %v712, %v716
    %v720 = vsel %vm165, %v718, 0
    %722 = vmatpush.msra.mxu0 0.0
    %723 = vmatpush.msra.mxu0 0.0
    %724 = vmatpush.msra.mxu0 0.0
    %725 = vmatpush.msra.mxu0 0.0
    %726 = vmatpush.msra.mxu0 0.0
    %727 = vmatpush.msra.mxu0 0.0
    %728 = vmatpush.msra.mxu0 0.0
    %729 = vmatpush.msra.mxu0 0.0
    %730 = vmatpush.msra.mxu0 0.0
    %731 = vmatpush.msra.mxu0 0.0
    %732 = vmatpush.msra.mxu0 0.0
    %733 = vmatpush.msra.mxu0 0.0
    %734 = vmatpush.msra.mxu0 %v116
    %735 = vmatpush.msra.mxu0 %v115
    %736 = vmatpush.msra.mxu0 %v114
    %737 = vmatpush.msra.mxu0 %v113
    %738 = vmatmul.f32.gmra.mxu0 %v720
    %v739 = vpop.f32.mrf.mxu0
    %v740 = vadd.f32 0.0, %v739
    %741 = vdwg.mxu0
    %v742 = vadd.f32 %v740, %v190
    %v743 = vxor.u32 %v742, 2147483648
    %v744 = vmul.f32 %v743, 1.442695
    %v745 = vpow.pop %v744
    %v746 = vadd.f32 %v745, 1.0
    %v747 = vrcp.pop %v746
    %v748 = vmul.f32 %v746, %v747
    %v749 = vsub.f32 1.0, %v748
    %v750 = vmul.f32 %v747, %v749
    %v751 = vadd.f32 %v747, %v750
    %vm752 = vweird.f32 %v746
    %vm753 = vweird.f32 %v747
    %vm754 = vmor %vm752, %vm753
    %v755 = vsel %vm754, %v747, %v751
    %v756 = vand.u32 2147483647, %v746
    %vm757 = vcmp.eq.f32.partialorder %v756, 8.507059e+37
    %v758 = vand.u32 %v746, 2147483648
    %v759 = vor.u32 1.1754944e-38, %v758
    %v760 = vsel %vm757, %v759, %v755
    %v761 = vmul.f32 1.0, %v760
    %v762 = vmul.f32 %v761, 2.0
    %v763 = vsub.f32 %v762, 1.0
    %v764 = vmul.f32 %v761, %v664
    %766 = vrot.lane.b32.xlu0 %v763, 96
    %v767 = vpop.permute.xlu0 %766
    %v769 = vmul.f32 %v761, %v767
    %771 = vrot.lane.b32.xlu0 %v769, 16
    %v772 = vpop.permute.xlu0 %771
    %v774 = vadd.f32 %v764, %v772
    %v775 = vtanh.pop %v774
    %777 = vrot.lane.b32.xlu0 %v775, 32
    %v778 = vpop.permute.xlu0 %777
    %v780 = vmul.f32 %v761, %v778
    %v781 = vadd.f32 %v108, %v740
    %v782 = vxor.u32 %v781, 2147483648
    %v783 = vmul.f32 %v782, 1.442695
    %v784 = vpow.pop %v783
    %v785 = vadd.f32 %v784, 1.0
    %v786 = vrcp.pop %v785
    %v787 = vmul.f32 %v785, %v786
    %v788 = vsub.f32 1.0, %v787
    %v789 = vmul.f32 %v786, %v788
    %v790 = vadd.f32 %v786, %v789
    %vm791 = vweird.f32 %v785
    %vm792 = vweird.f32 %v786
    %vm793 = vmor %vm791, %vm792
    %v794 = vsel %vm793, %v786, %v790
    %v795 = vand.u32 2147483647, %v785
    %vm796 = vcmp.eq.f32.partialorder %v795, 8.507059e+37
    %v797 = vand.u32 %v785, 2147483648
    %v798 = vor.u32 1.1754944e-38, %v797
    %v799 = vsel %vm796, %v798, %v794
    %v800 = vmul.f32 1.0, %v799
    %v801 = vmul.f32 %v800, 2.0
    %v802 = vsub.f32 %v801, 1.0
    %v803 = vmul.f32 %v800, %v703
    %805 = vrot.lane.b32.xlu0 %v802, 96
    %v806 = vpop.permute.xlu0 %805
    %v808 = vmul.f32 %v800, %v806
    %810 = vrot.lane.b32.xlu0 %v808, 16
    %v811 = vpop.permute.xlu0 %810
    %v813 = vadd.f32 %v803, %v811
    %v814 = vtanh.pop %v813
    %816 = vrot.lane.b32.xlu0 %v814, 32
    %v817 = vpop.permute.xlu0 %816
    %v819 = vmul.f32 %v800, %v817
    %821 = vrot.lane.b32.xlu0 %v819, 80
    %v822 = vpop.permute.xlu0 %821
    %825 = vrot.lane.b32.xlu0 %v780, 32
    %v826 = vpop.permute.xlu0 %825
    %v828 = vsel %vm163, %v822, %v826
    %v830 = vsel %vm165, %v828, 0
    %832 = vmatpush.msra.mxu0 0.0
    %833 = vmatpush.msra.mxu0 0.0
    %834 = vmatpush.msra.mxu0 0.0
    %835 = vmatpush.msra.mxu0 0.0
    %836 = vmatpush.msra.mxu0 0.0
    %837 = vmatpush.msra.mxu0 0.0
    %838 = vmatpush.msra.mxu0 0.0
    %839 = vmatpush.msra.mxu0 0.0
    %840 = vmatpush.msra.mxu0 0.0
    %841 = vmatpush.msra.mxu0 0.0
    %842 = vmatpush.msra.mxu0 0.0
    %843 = vmatpush.msra.mxu0 0.0
    %844 = vmatpush.msra.mxu0 %v116
    %845 = vmatpush.msra.mxu0 %v115
    %846 = vmatpush.msra.mxu0 %v114
    %847 = vmatpush.msra.mxu0 %v113
    %848 = vmatmul.f32.gmra.mxu0 %v830
    %v849 = vpop.f32.mrf.mxu0
    %v850 = vadd.f32 0.0, %v849
    %851 = vdwg.mxu0
    %v852 = vadd.f32 %v850, %v190
    %v853 = vxor.u32 %v852, 2147483648
    %v854 = vmul.f32 %v853, 1.442695
    %v855 = vpow.pop %v854
    %v856 = vadd.f32 %v855, 1.0
    %v857 = vrcp.pop %v856
    %v858 = vmul.f32 %v856, %v857
    %v859 = vsub.f32 1.0, %v858
    %v860 = vmul.f32 %v857, %v859
    %v861 = vadd.f32 %v857, %v860
    %vm862 = vweird.f32 %v856
    %vm863 = vweird.f32 %v857
    %vm864 = vmor %vm862, %vm863
    %v865 = vsel %vm864, %v857, %v861
    %v866 = vand.u32 2147483647, %v856
    %vm867 = vcmp.eq.f32.partialorder %v866, 8.507059e+37
    %v868 = vand.u32 %v856, 2147483648
    %v869 = vor.u32 1.1754944e-38, %v868
    %v870 = vsel %vm867, %v869, %v865
    %v871 = vmul.f32 1.0, %v870
    %v872 = vmul.f32 %v871, 2.0
    %v873 = vsub.f32 %v872, 1.0
    %v874 = vmul.f32 %v871, %v774
    %876 = vrot.lane.b32.xlu0 %v873, 96
    %v877 = vpop.permute.xlu0 %876
    %v879 = vmul.f32 %v871, %v877
    %881 = vrot.lane.b32.xlu0 %v879, 16
    %v882 = vpop.permute.xlu0 %881
    %v884 = vadd.f32 %v874, %v882
    %v885 = vtanh.pop %v884
    %887 = vrot.lane.b32.xlu0 %v885, 32
    %v888 = vpop.permute.xlu0 %887
    %v890 = vmul.f32 %v871, %v888
    %v891 = vadd.f32 %v111, %v850
    %v892 = vxor.u32 %v891, 2147483648
    %v893 = vmul.f32 %v892, 1.442695
    %v894 = vpow.pop %v893
    %v895 = vadd.f32 %v894, 1.0
    %v896 = vrcp.pop %v895
    %v897 = vmul.f32 %v895, %v896
    %v898 = vsub.f32 1.0, %v897
    %v899 = vmul.f32 %v896, %v898
    %v900 = vadd.f32 %v896, %v899
    %vm901 = vweird.f32 %v895
    %vm902 = vweird.f32 %v896
    %vm903 = vmor %vm901, %vm902
    %v904 = vsel %vm903, %v896, %v900
    %v905 = vand.u32 2147483647, %v895
    %vm906 = vcmp.eq.f32.partialorder %v905, 8.507059e+37
    %v907 = vand.u32 %v895, 2147483648
    %v908 = vor.u32 1.1754944e-38, %v907
    %v909 = vsel %vm906, %v908, %v904
    %v910 = vmul.f32 1.0, %v909
    %v911 = vmul.f32 %v910, 2.0
    %v912 = vsub.f32 %v911, 1.0
    %v913 = vmul.f32 %v910, %v813
    %915 = vrot.lane.b32.xlu0 %v912, 96
    %v916 = vpop.permute.xlu0 %915
    %v918 = vmul.f32 %v910, %v916
    %920 = vrot.lane.b32.xlu0 %v918, 16
    %v921 = vpop.permute.xlu0 %920
    %v923 = vadd.f32 %v913, %v921
    %v924 = vtanh.pop %v923
    %926 = vrot.lane.b32.xlu0 %v924, 32
    %v927 = vpop.permute.xlu0 %926
    %v929 = vmul.f32 %v910, %v927
    %931 = vrot.lane.b32.xlu0 %v929, 80
    %v932 = vpop.permute.xlu0 %931
    %935 = vrot.lane.b32.xlu0 %v890, 32
    %v936 = vpop.permute.xlu0 %935
    %v938 = vsel %vm163, %v932, %v936
    %v940 = vsel %vm165, %v938, 0
    %942 = vmatpush.msra.mxu0 0.0
    %943 = vmatpush.msra.mxu0 0.0
    %944 = vmatpush.msra.mxu0 0.0
    %945 = vmatpush.msra.mxu0 0.0
    %946 = vmatpush.msra.mxu0 0.0
    %947 = vmatpush.msra.mxu0 0.0
    %948 = vmatpush.msra.mxu0 0.0
    %949 = vmatpush.msra.mxu0 0.0
    %950 = vmatpush.msra.mxu0 0.0
    %951 = vmatpush.msra.mxu0 0.0
    %952 = vmatpush.msra.mxu0 0.0
    %953 = vmatpush.msra.mxu0 0.0
    %954 = vmatpush.msra.mxu0 %v116
    %955 = vmatpush.msra.mxu0 %v115
    %956 = vmatpush.msra.mxu0 %v114
    %957 = vmatpush.msra.mxu0 %v113
    %958 = vmatmul.f32.gmra.mxu0 %v940
    %v959 = vpop.f32.mrf.mxu0
    %v960 = vadd.f32 0.0, %v959
    %961 = vdwg.mxu0
    %v962 = vadd.f32 %v960, %v190
    %v963 = vxor.u32 %v962, 2147483648
    %v964 = vmul.f32 %v963, 1.442695
    %v965 = vpow.pop %v964
    %v966 = vadd.f32 %v965, 1.0
    %v967 = vrcp.pop %v966
    %v968 = vmul.f32 %v966, %v967
    %v969 = vsub.f32 1.0, %v968
    %v970 = vmul.f32 %v967, %v969
    %v971 = vadd.f32 %v967, %v970
    %vm972 = vweird.f32 %v966
    %vm973 = vweird.f32 %v967
    %vm974 = vmor %vm972, %vm973
    %v975 = vsel %vm974, %v967, %v971
    %v976 = vand.u32 2147483647, %v966
    %vm977 = vcmp.eq.f32.partialorder %v976, 8.507059e+37
    %v978 = vand.u32 %v966, 2147483648
    %v979 = vor.u32 1.1754944e-38, %v978
    %v980 = vsel %vm977, %v979, %v975
    %v981 = vmul.f32 1.0, %v980
    %v982 = vmul.f32 %v981, 2.0
    %v983 = vsub.f32 %v982, 1.0
    %v984 = vmul.f32 %v981, %v884
    %986 = vrot.lane.b32.xlu0 %v983, 96
    %v987 = vpop.permute.xlu0 %986
    %v989 = vmul.f32 %v981, %v987
    %991 = vrot.lane.b32.xlu0 %v989, 16
    %v992 = vpop.permute.xlu0 %991
    %v994 = vadd.f32 %v984, %v992
    %v995 = vtanh.pop %v994
    %997 = vrot.lane.b32.xlu0 %v995, 32
    %v998 = vpop.permute.xlu0 %997
    %v1000 = vmul.f32 %v981, %v998
    %v1001 = vld [vmem:[%s5] sm:$0xff]
    %v1002 = vld [vmem:[%s5 + $0x8] sm:$0xff]
    %v1003 = vld [vmem:[%s6] sm:$0x1]
    %v1005 = vperm.slane %v1003, 0
    %1008 = vrot.lane.b32.xlu0 %v1000, 16
    %v1009 = vpop.permute.xlu0 %1008
    %v1010 = vsel %vm163, %v1009, 0
    %1012 = vmatpush.msra.mxu0 0.0
    %1013 = vmatpush.msra.mxu0 0.0
    %1014 = vmatpush.msra.mxu0 0.0
    %1015 = vmatpush.msra.mxu0 0.0
    %1016 = vmatpush.msra.mxu0 0.0
    %1017 = vmatpush.msra.mxu0 0.0
    %1018 = vmatpush.msra.mxu0 0.0
    %1019 = vmatpush.msra.mxu0 0.0
    %1020 = vmatpush.msra.mxu0 0.0
    %1021 = vmatpush.msra.mxu0 0.0
    %1022 = vmatpush.msra.mxu0 0.0
    %1023 = vmatpush.msra.mxu0 0.0
    %1024 = vmatpush.msra.mxu0 0.0
    %1025 = vmatpush.msra.mxu0 0.0
    %1026 = vmatpush.msra.mxu0 %v1002
    %1027 = vmatpush.msra.mxu0 %v1001
    %1028 = vmatmul.f32.gmra.mxu0 %v1010
    %v1029 = vpop.f32.mrf.mxu0
    %v1030 = vadd.f32 %v1005, %v1029
    %1031 = vdwg.mxu0
    %vm1032 = vcmask 9216
    %1033 = vst.msk [vmem:[#allocation2] sm:$0x3] %vm1032, %v1030
    // Predicated region
    $region30: #{lstm_forward.1} parent=1 // pred_check
      _
    $region31: #{lstm_forward.1} parent=1 // pred_check_branch
      %1035 = sbr.rel (0) target = $region33
    $region32: #{lstm_forward.1} parent=1 // pred_region
      %1037 = vsyncadd [#allocation3], 0
      %s1039 = sshll.u32 [#allocation2], 4
      %s1040 = int_to_ptr.vmem [resolvable:$true] %s1039
      %s1041 = sshll.u32 %s7, 4
      %s1042 = int_to_ptr.hbm [resolvable:$true] %s1041
      %1044 = dma.vmem_to_hbm [thread:$0]  %s1040, 32, %s1042, [#allocation3]
    $region33: #{lstm_forward.1} parent=1 // pred_fallthru
      _
    // Predicated region
    $region34: #{lstm_forward.1} parent=1 // pred_check
      _
    $region35: #{lstm_forward.1} parent=1 // pred_check_branch
      %1046 = sbr.rel (0) target = $region37
    $region36: #{lstm_forward.1} parent=1 // pred_region
      %1048 = dma.done [#allocation3], 32
    $region37: #{lstm_forward.1} parent=1 // pred_fallthru
      _
    %1049 = vsyncpa [#allocation3], 1

</llo_original>
